<compile_context>
chip_gen: v5e
topology: v5e:2x2
jax: 0.10.0
libtpu: 0.0.40
codegen_flags: <defaults>
</compile_context>

<pallas_src>
import jax
import jax.numpy as jnp
from jax.experimental import pallas as pl
from jax.experimental.pallas import tpu as pltpu

LEAKY_SLOPE = 0.01
LANE = 128


def _cdiv(a, b):
    return -(-a // b)


def _round_up(x, m):
    return _cdiv(x, m) * m


# ----------------------------------------------------------------------------
# Pallas kernels
# ----------------------------------------------------------------------------
def _matmul_bias_lrelu_kernel(x_ref, w_ref, b_ref, o_ref):
    """o = leaky_relu(x @ w + b). bf16 MXU operands, f32 accum + epilogue."""
    y = jnp.dot(x_ref[...], w_ref[...], preferred_element_type=jnp.float32)
    y = y + b_ref[...]                       # (1, Npad) broadcast over rows
    o_ref[...] = jnp.where(y >= 0.0, y, LEAKY_SLOPE * y)


def _head_kernel(x_ref, w5_ref, b5_ref, w1_ref, b1_ref, w2_ref, b2_ref,
                 w3_ref, b3_ref, lat_ref, out_ref):
    """Fused conv5 (full-patch linear, NO activation) + decoder fc1/fc2/fc3.

    All weights are VMEM-resident; the (B, 32..256) intermediates live in
    vregs, so the 4 original kernel launches + HBM trips collapse to one.
    """
    lat = jnp.dot(x_ref[...], w5_ref[...], preferred_element_type=jnp.float32)
    lat = lat + b5_ref[...]
    lat_ref[...] = lat                       # latent_vec output (f32)
    h = lat
    for w_ref, b_ref in ((w1_ref, b1_ref), (w2_ref, b2_ref), (w3_ref, b3_ref)):
        h = jnp.dot(h.astype(jnp.bfloat16), w_ref[...],
                    preferred_element_type=jnp.float32) + b_ref[...]
        h = jnp.where(h >= 0.0, h, LEAKY_SLOPE * h)
    out_ref[...] = h                         # shape_param output (f32)


# ----------------------------------------------------------------------------
# Conv2d = im2col (NHWC, fused by XLA under jit) + Pallas fused matmul
# ----------------------------------------------------------------------------
def _im2col_nhwc(x, k, stride, pad):
    """x: (B, H, W, C) -> cols: (B*Ho*Wo, k*k*C), patch order = (kh, kw, C)."""
    B, H, W, C = x.shape
    xp = jnp.pad(x, ((0, 0), (pad, pad), (pad, pad), (0, 0)))
    Ho = (H + 2 * pad - k) // stride + 1
    Wo = (W + 2 * pad - k) // stride + 1
    patches = []
    for kh in range(k):
        for kw in range(k):
            patches.append(
                xp[:, kh:kh + stride * (Ho - 1) + 1:stride,
                   kw:kw + stride * (Wo - 1) + 1:stride, :])
    cols = jnp.stack(patches, axis=3)                # (B, Ho, Wo, k*k, C)
    return cols.reshape(B * Ho * Wo, k * k * C), B, Ho, Wo


def _fused_conv_matmul(cols, wmat, brow, tm_target=512):
    """cols: (M, K) bf16, wmat: (K, Npad) bf16, brow: (1, Npad) f32."""
    M, K = cols.shape
    Npad = wmat.shape[1]
    nblk = _cdiv(M, tm_target)                       # number of M tiles
    tm = _round_up(_cdiv(M, nblk), 16)               # bf16 sublane-aligned
    Mpad = tm * nblk
    if Mpad != M:
        cols = jnp.pad(cols, ((0, Mpad - M), (0, 0)))
    return pl.pallas_call(
        _matmul_bias_lrelu_kernel,
        out_shape=jax.ShapeDtypeStruct((Mpad, Npad), jnp.float32),
        grid=(nblk,),
        in_specs=[
            pl.BlockSpec((tm, K), lambda i: (i, 0)),
            pl.BlockSpec((K, Npad), lambda i: (0, 0)),
            pl.BlockSpec((1, Npad), lambda i: (0, 0)),
        ],
        out_specs=pl.BlockSpec((tm, Npad), lambda i: (i, 0)),
        compiler_params=pltpu.CompilerParams(
            dimension_semantics=("parallel",)),      # shard M over v7x's 2 TCs
    )(cols, wmat, brow)


def _conv2d_lrelu(x, wmat, brow, oc, k=4, stride=2, pad=2):
    cols, B, Ho, Wo = _im2col_nhwc(x, k, stride, pad)
    M = cols.shape[0]
    y = _fused_conv_matmul(cols.astype(jnp.bfloat16), wmat, brow)
    return y[:M, :oc].reshape(B, Ho, Wo, oc)         # slice off lane/row pad


# ----------------------------------------------------------------------------
# Fused head: conv5 + decoder (single pallas_call)
# ----------------------------------------------------------------------------
def _head_call(x4, head):
    B = x4.shape[0]
    latent = head["w5"].shape[1]
    out_dim = head["w3"].shape[1]
    ins = (x4, head["w5"], head["b5"], head["w1"], head["b1"],
           head["w2"], head["b2"], head["w3"], head["b3"])
    return pl.pallas_call(
        _head_kernel,
        out_shape=(jax.ShapeDtypeStruct((B, latent), jnp.float32),
                   jax.ShapeDtypeStruct((B, out_dim), jnp.float32)),
        grid=(1,),
        in_specs=[pl.BlockSpec(a.shape, lambda i: (0, 0)) for a in ins],
        out_specs=(pl.BlockSpec((B, latent), lambda i: (0, 0)),
                   pl.BlockSpec((B, out_dim), lambda i: (0, 0))),
    )(*ins)


# ----------------------------------------------------------------------------
# Forward (jitted end-to-end)
# ----------------------------------------------------------------------------
def make_forward(latent_size):
    ocs = (latent_size // 8, latent_size // 4, latent_size // 2, latent_size)

    def forward(prep, img_nchw, pt):
        # TODO(synk): `pt` feeds MultipleShapesEvaluation / BooleanLayer, which
        # are undefined in the reference source; forward stops after decoder.
        del pt
        y = jnp.transpose(img_nchw, (0, 2, 3, 1))    # NHWC end-to-end
        for i in range(4):
            y = _conv2d_lrelu(y, prep["conv_w"][i], prep["conv_b"][i], ocs[i])
        # conv5: 5x5 -> 1x1 with k=4, s=2, pad=0 -> only the top-left 4x4 patch.
        x4 = y[:, :4, :4, :].reshape(y.shape[0], -1).astype(jnp.bfloat16)
        latent_vec, shape_param = _head_call(x4, prep["head"])
        return latent_vec, shape_param

    return jax.jit(forward)


# ----------------------------------------------------------------------------
# Parameter init (torch layouts) + one-time prepare (permute / pad / bf16 cast)
# ----------------------------------------------------------------------------
def _xavier_uniform(key, out_f, in_f):
    bound = (6.0 / (in_f + out_f)) ** 0.5
    return jax.random.uniform(key, (out_f, in_f), jnp.float32, -bound, bound)


def _conv_init(key, oc, ic, k):
    fan_in = ic * k * k
    bound = 1.0 / (fan_in ** 0.5)
    kw, kb = jax.random.split(key)
    w = jax.random.uniform(kw, (oc, ic, k, k), jnp.float32, -bound, bound)
    b = jax.random.uniform(kb, (oc,), jnp.float32, -bound, bound)
    return w, b


def init_params(key, num_channels=1, latent_size=32):
    ks = jax.random.split(key, 8)
    ls = latent_size
    enc = {}
    enc["w1"], enc["b1"] = _conv_init(ks[0], ls // 8, num_channels, 4)
    enc["w2"], enc["b2"] = _conv_init(ks[1], ls // 4, ls // 8, 4)
    enc["w3"], enc["b3"] = _conv_init(ks[2], ls // 2, ls // 4, 4)
    enc["w4"], enc["b4"] = _conv_init(ks[3], ls,      ls // 2, 4)
    enc["w5"], enc["b5"] = _conv_init(ks[4], ls,      ls,      4)
    dec = {
        "w1": _xavier_uniform(ks[5], ls * 2, ls),
        "b1": jnp.zeros((ls * 2,), jnp.float32),
        "w2": _xavier_uniform(ks[6], ls * 4, ls * 2),
        "b2": jnp.zeros((ls * 4,), jnp.float32),
        "w3": _xavier_uniform(ks[7], ls * 8, ls * 4),
        "b3": jnp.zeros((ls * 8,), jnp.float32),
    }
    return {"enc": enc, "dec": dec}


def prepare_params(params):
    """One-time static transform: (Oc,C,kh,kw) -> (kh*kw*C, Oc), pad Oc to 128
    lanes, cast matmul operands to bf16, biases stay f32 row vectors."""
    enc, dec = params["enc"], params["dec"]
    conv_w, conv_b = [], []
    for i in range(1, 5):
        w, b = enc[f"w{i}"], enc[f"b{i}"]
        oc, c, k, _ = w.shape
        wmat = jnp.transpose(w, (2, 3, 1, 0)).reshape(k * k * c, oc)
        npad = _round_up(oc, LANE)
        conv_w.append(jnp.pad(wmat, ((0, 0), (0, npad - oc))).astype(jnp.bfloat16))
        conv_b.append(jnp.pad(b, (0, npad - oc)).reshape(1, npad).astype(jnp.float32))
    w5, b5 = enc["w5"], enc["b5"]
    oc5, c5, k5, _ = w5.shape
    head = {
        "w5": jnp.transpose(w5, (2, 3, 1, 0)).reshape(k5 * k5 * c5, oc5).astype(jnp.bfloat16),
        "b5": b5.reshape(1, -1).astype(jnp.float32),
        "w1": dec["w1"].T.astype(jnp.bfloat16),
        "b1": dec["b1"].reshape(1, -1).astype(jnp.float32),
        "w2": dec["w2"].T.astype(jnp.bfloat16),
        "b2": dec["b2"].reshape(1, -1).astype(jnp.float32),
        "w3": dec["w3"].T.astype(jnp.bfloat16),
        "b3": dec["b3"].reshape(1, -1).astype(jnp.float32),
    }
    return {"conv_w": conv_w, "conv_b": conv_b, "head": head}


# ----------------------------------------------------------------------------
if __name__ == "__main__":
    key = jax.random.PRNGKey(0)
    k_img, k_pt, k_params = jax.random.split(key, 3)

    B, C, LATENT = 2, 1, 32
    # Encoder requires 64x64 spatial input (conv5 reduces 5x5 -> 1x1).
    img = jax.random.uniform(k_img, (B, C, 64, 64), jnp.float32)
    pt = jax.random.uniform(k_pt, (B, 8, 3), jnp.float32)  # unused (see TODO)

    params = init_params(k_params, num_channels=C, latent_size=LATENT)
    prep = prepare_params(params)
    forward = make_forward(LATENT)

    latent_vec, shape_param = forward(prep, img, pt)
    jax.block_until_ready((latent_vec, shape_param))

    assert latent_vec.shape == (B, LATENT)
    assert shape_param.shape == (B, LATENT * 8)
    print("KERNEL_OK")
</pallas_src>

<mosaic_0001>
module attributes {stable_mosaic.version = 11 : i64} {
  func.func @_matmul_bias_lrelu_kernel(%arg0: i32, %arg1: memref<448x16xbf16, #tpu.memory_space<vmem>>, %arg2: memref<16x128xbf16, #tpu.memory_space<vmem>>, %arg3: memref<1x128xf32, #tpu.memory_space<vmem>>, %arg4: memref<448x128xf32, #tpu.memory_space<vmem>>) attributes {dimension_semantics = [#tpu.dimension_semantics<parallel>], iteration_bounds = array<i64: 5>, scalar_prefetch = 0 : i64, scratch_operands = 0 : i64, tpu.core_type = #tpu.core_type<tc>, window_params = [{transform_indices = @transform_0, window_bounds = array<i64: 448, 16>}, {pipeline_mode = #tpu.pipeline_mode<synchronous>, transform_indices = @transform_1, window_bounds = array<i64: 16, 128>}, {pipeline_mode = #tpu.pipeline_mode<synchronous>, transform_indices = @transform_2, window_bounds = array<i64: 1, 128>}, {transform_indices = @transform_3, window_bounds = array<i64: 448, 128>}]} {
    %c0 = arith.constant 0 : index
    %c0_0 = arith.constant 0 : index
    %0 = vector.load %arg1[%c0, %c0_0] : memref<448x16xbf16, #tpu.memory_space<vmem>>, vector<448x16xbf16>
    %c0_1 = arith.constant 0 : index
    %c0_2 = arith.constant 0 : index
    %1 = vector.load %arg2[%c0_1, %c0_2] : memref<16x128xbf16, #tpu.memory_space<vmem>>, vector<16x128xbf16>
    %cst = arith.constant dense<0.000000e+00> : vector<448x128xf32>
    %2 = tpu.matmul %0, %1, %cst {dimension_numbers = #tpu.dot_dimension_numbers<[1], [0], [0], [1], [0, 0, 1, 1], [], []>} : vector<448x16xbf16>, vector<16x128xbf16>, vector<448x128xf32> -> vector<448x128xf32>
    %c0_3 = arith.constant 0 : index
    %c0_4 = arith.constant 0 : index
    %3 = vector.load %arg3[%c0_3, %c0_4] : memref<1x128xf32, #tpu.memory_space<vmem>>, vector<1x128xf32>
    %4 = vector.broadcast %3 : vector<1x128xf32> to vector<448x128xf32>
    %5 = arith.addf %2, %4 : vector<448x128xf32>
    %cst_5 = arith.constant 0.000000e+00 : f32
    %6 = vector.broadcast %cst_5 : f32 to vector<448x128xf32>
    %7 = arith.cmpf oge, %5, %6 : vector<448x128xf32>
    %cst_6 = arith.constant 0.00999999977 : f32
    %8 = vector.broadcast %cst_6 : f32 to vector<448x128xf32>
    %9 = arith.mulf %8, %5 : vector<448x128xf32>
    %10 = arith.select %7, %5, %9 : vector<448x128xi1>, vector<448x128xf32>
    %c0_7 = arith.constant 0 : index
    %c0_8 = arith.constant 0 : index
    %11 = vector.load %arg4[%c0_7, %c0_8] : memref<448x128xf32, #tpu.memory_space<vmem>>, vector<448x128xf32>
    tpu.vector_store %arg4[%c0_7, %c0_8], %10 {strides = array<i32>} : memref<448x128xf32, #tpu.memory_space<vmem>>, vector<448x128xf32>,
    return
  }
  func.func @transform_0(%arg0: i32) -> (i32, i32) {
    %c0_i32 = arith.constant 0 : i32
    %c0_i32_0 = arith.constant 0 : i32
    return %arg0, %c0_i32 : i32, i32
  }
  func.func @transform_1(%arg0: i32) -> (i32, i32) {
    %c0_i32 = arith.constant 0 : i32
    %c0_i32_0 = arith.constant 0 : i32
    %c0_i32_1 = arith.constant 0 : i32
    return %c0_i32, %c0_i32_0 : i32, i32
  }
  func.func @transform_2(%arg0: i32) -> (i32, i32) {
    %c0_i32 = arith.constant 0 : i32
    %c0_i32_0 = arith.constant 0 : i32
    %c0_i32_1 = arith.constant 0 : i32
    return %c0_i32, %c0_i32_0 : i32, i32
  }
  func.func @transform_3(%arg0: i32) -> (i32, i32) {
    %c0_i32 = arith.constant 0 : i32
    %c0_i32_0 = arith.constant 0 : i32
    return %arg0, %c0_i32 : i32, i32
  }
}

module attributes {stable_mosaic.version = 11 : i64} {
  func.func @_matmul_bias_lrelu_kernel(%arg0: i32, %arg1: memref<304x64xbf16, #tpu.memory_space<vmem>>, %arg2: memref<64x128xbf16, #tpu.memory_space<vmem>>, %arg3: memref<1x128xf32, #tpu.memory_space<vmem>>, %arg4: memref<304x128xf32, #tpu.memory_space<vmem>>) attributes {dimension_semantics = [#tpu.dimension_semantics<parallel>], iteration_bounds = array<i64: 2>, scalar_prefetch = 0 : i64, scratch_operands = 0 : i64, tpu.core_type = #tpu.core_type<tc>, window_params = [{transform_indices = @transform_0, window_bounds = array<i64: 304, 64>}, {pipeline_mode = #tpu.pipeline_mode<synchronous>, transform_indices = @transform_1, window_bounds = array<i64: 64, 128>}, {pipeline_mode = #tpu.pipeline_mode<synchronous>, transform_indices = @transform_2, window_bounds = array<i64: 1, 128>}, {transform_indices = @transform_3, window_bounds = array<i64: 304, 128>}]} {
    %c0 = arith.constant 0 : index
    %c0_0 = arith.constant 0 : index
    %0 = vector.load %arg1[%c0, %c0_0] : memref<304x64xbf16, #tpu.memory_space<vmem>>, vector<304x64xbf16>
    %c0_1 = arith.constant 0 : index
    %c0_2 = arith.constant 0 : index
    %1 = vector.load %arg2[%c0_1, %c0_2] : memref<64x128xbf16, #tpu.memory_space<vmem>>, vector<64x128xbf16>
    %cst = arith.constant dense<0.000000e+00> : vector<304x128xf32>
    %2 = tpu.matmul %0, %1, %cst {dimension_numbers = #tpu.dot_dimension_numbers<[1], [0], [0], [1], [0, 0, 1, 1], [], []>} : vector<304x64xbf16>, vector<64x128xbf16>, vector<304x128xf32> -> vector<304x128xf32>
    %c0_3 = arith.constant 0 : index
    %c0_4 = arith.constant 0 : index
    %3 = vector.load %arg3[%c0_3, %c0_4] : memref<1x128xf32, #tpu.memory_space<vmem>>, vector<1x128xf32>
    %4 = vector.broadcast %3 : vector<1x128xf32> to vector<304x128xf32>
    %5 = arith.addf %2, %4 : vector<304x128xf32>
    %cst_5 = arith.constant 0.000000e+00 : f32
    %6 = vector.broadcast %cst_5 : f32 to vector<304x128xf32>
    %7 = arith.cmpf oge, %5, %6 : vector<304x128xf32>
    %cst_6 = arith.constant 0.00999999977 : f32
    %8 = vector.broadcast %cst_6 : f32 to vector<304x128xf32>
    %9 = arith.mulf %8, %5 : vector<304x128xf32>
    %10 = arith.select %7, %5, %9 : vector<304x128xi1>, vector<304x128xf32>
    %c0_7 = arith.constant 0 : index
    %c0_8 = arith.constant 0 : index
    %11 = vector.load %arg4[%c0_7, %c0_8] : memref<304x128xf32, #tpu.memory_space<vmem>>, vector<304x128xf32>
    tpu.vector_store %arg4[%c0_7, %c0_8], %10 {strides = array<i32>} : memref<304x128xf32, #tpu.memory_space<vmem>>, vector<304x128xf32>,
    return
  }
  func.func @transform_0(%arg0: i32) -> (i32, i32) {
    %c0_i32 = arith.constant 0 : i32
    %c0_i32_0 = arith.constant 0 : i32
    return %arg0, %c0_i32 : i32, i32
  }
  func.func @transform_1(%arg0: i32) -> (i32, i32) {
    %c0_i32 = arith.constant 0 : i32
    %c0_i32_0 = arith.constant 0 : i32
    %c0_i32_1 = arith.constant 0 : i32
    return %c0_i32, %c0_i32_0 : i32, i32
  }
  func.func @transform_2(%arg0: i32) -> (i32, i32) {
    %c0_i32 = arith.constant 0 : i32
    %c0_i32_0 = arith.constant 0 : i32
    %c0_i32_1 = arith.constant 0 : i32
    return %c0_i32, %c0_i32_0 : i32, i32
  }
  func.func @transform_3(%arg0: i32) -> (i32, i32) {
    %c0_i32 = arith.constant 0 : i32
    %c0_i32_0 = arith.constant 0 : i32
    return %arg0, %c0_i32 : i32, i32
  }
}

module attributes {stable_mosaic.version = 11 : i64} {
  func.func @_matmul_bias_lrelu_kernel(%arg0: i32, %arg1: memref<176x128xbf16, #tpu.memory_space<vmem>>, %arg2: memref<128x128xbf16, #tpu.memory_space<vmem>>, %arg3: memref<1x128xf32, #tpu.memory_space<vmem>>, %arg4: memref<176x128xf32, #tpu.memory_space<vmem>>) attributes {dimension_semantics = [#tpu.dimension_semantics<parallel>], iteration_bounds = array<i64: 1>, scalar_prefetch = 0 : i64, scratch_operands = 0 : i64, tpu.core_type = #tpu.core_type<tc>, window_params = [{transform_indices = @transform_0, window_bounds = array<i64: 176, 128>}, {pipeline_mode = #tpu.pipeline_mode<synchronous>, transform_indices = @transform_1, window_bounds = array<i64: 128, 128>}, {pipeline_mode = #tpu.pipeline_mode<synchronous>, transform_indices = @transform_2, window_bounds = array<i64: 1, 128>}, {transform_indices = @transform_3, window_bounds = array<i64: 176, 128>}]} {
    %c0 = arith.constant 0 : index
    %c0_0 = arith.constant 0 : index
    %0 = vector.load %arg1[%c0, %c0_0] : memref<176x128xbf16, #tpu.memory_space<vmem>>, vector<176x128xbf16>
    %c0_1 = arith.constant 0 : index
    %c0_2 = arith.constant 0 : index
    %1 = vector.load %arg2[%c0_1, %c0_2] : memref<128x128xbf16, #tpu.memory_space<vmem>>, vector<128x128xbf16>
    %cst = arith.constant dense<0.000000e+00> : vector<176x128xf32>
    %2 = tpu.matmul %0, %1, %cst {dimension_numbers = #tpu.dot_dimension_numbers<[1], [0], [0], [1], [0, 0, 1, 1], [], []>} : vector<176x128xbf16>, vector<128x128xbf16>, vector<176x128xf32> -> vector<176x128xf32>
    %c0_3 = arith.constant 0 : index
    %c0_4 = arith.constant 0 : index
    %3 = vector.load %arg3[%c0_3, %c0_4] : memref<1x128xf32, #tpu.memory_space<vmem>>, vector<1x128xf32>
    %4 = vector.broadcast %3 : vector<1x128xf32> to vector<176x128xf32>
    %5 = arith.addf %2, %4 : vector<176x128xf32>
    %cst_5 = arith.constant 0.000000e+00 : f32
    %6 = vector.broadcast %cst_5 : f32 to vector<176x128xf32>
    %7 = arith.cmpf oge, %5, %6 : vector<176x128xf32>
    %cst_6 = arith.constant 0.00999999977 : f32
    %8 = vector.broadcast %cst_6 : f32 to vector<176x128xf32>
    %9 = arith.mulf %8, %5 : vector<176x128xf32>
    %10 = arith.select %7, %5, %9 : vector<176x128xi1>, vector<176x128xf32>
    %c0_7 = arith.constant 0 : index
    %c0_8 = arith.constant 0 : index
    %11 = vector.load %arg4[%c0_7, %c0_8] : memref<176x128xf32, #tpu.memory_space<vmem>>, vector<176x128xf32>
    tpu.vector_store %arg4[%c0_7, %c0_8], %10 {strides = array<i32>} : memref<176x128xf32, #tpu.memory_space<vmem>>, vector<176x128xf32>,
    return
  }
  func.func @transform_0(%arg0: i32) -> (i32, i32) {
    %c0_i32 = arith.constant 0 : i32
    %c0_i32_0 = arith.constant 0 : i32
    return %arg0, %c0_i32 : i32, i32
  }
  func.func @transform_1(%arg0: i32) -> (i32, i32) {
    %c0_i32 = arith.constant 0 : i32
    %c0_i32_0 = arith.constant 0 : i32
    %c0_i32_1 = arith.constant 0 : i32
    return %c0_i32, %c0_i32_0 : i32, i32
  }
  func.func @transform_2(%arg0: i32) -> (i32, i32) {
    %c0_i32 = arith.constant 0 : i32
    %c0_i32_0 = arith.constant 0 : i32
    %c0_i32_1 = arith.constant 0 : i32
    return %c0_i32, %c0_i32_0 : i32, i32
  }
  func.func @transform_3(%arg0: i32) -> (i32, i32) {
    %c0_i32 = arith.constant 0 : i32
    %c0_i32_0 = arith.constant 0 : i32
    return %arg0, %c0_i32 : i32, i32
  }
}

module attributes {stable_mosaic.version = 11 : i64} {
  func.func @_matmul_bias_lrelu_kernel(%arg0: i32, %arg1: memref<64x256xbf16, #tpu.memory_space<vmem>>, %arg2: memref<256x128xbf16, #tpu.memory_space<vmem>>, %arg3: memref<1x128xf32, #tpu.memory_space<vmem>>, %arg4: memref<64x128xf32, #tpu.memory_space<vmem>>) attributes {dimension_semantics = [#tpu.dimension_semantics<parallel>], iteration_bounds = array<i64: 1>, scalar_prefetch = 0 : i64, scratch_operands = 0 : i64, tpu.core_type = #tpu.core_type<tc>, window_params = [{transform_indices = @transform_0, window_bounds = array<i64: 64, 256>}, {pipeline_mode = #tpu.pipeline_mode<synchronous>, transform_indices = @transform_1, window_bounds = array<i64: 256, 128>}, {pipeline_mode = #tpu.pipeline_mode<synchronous>, transform_indices = @transform_2, window_bounds = array<i64: 1, 128>}, {transform_indices = @transform_3, window_bounds = array<i64: 64, 128>}]} {
    %c0 = arith.constant 0 : index
    %c0_0 = arith.constant 0 : index
    %0 = vector.load %arg1[%c0, %c0_0] : memref<64x256xbf16, #tpu.memory_space<vmem>>, vector<64x256xbf16>
    %c0_1 = arith.constant 0 : index
    %c0_2 = arith.constant 0 : index
    %1 = vector.load %arg2[%c0_1, %c0_2] : memref<256x128xbf16, #tpu.memory_space<vmem>>, vector<256x128xbf16>
    %cst = arith.constant dense<0.000000e+00> : vector<64x128xf32>
    %2 = tpu.matmul %0, %1, %cst {dimension_numbers = #tpu.dot_dimension_numbers<[1], [0], [0], [1], [0, 0, 1, 1], [], []>} : vector<64x256xbf16>, vector<256x128xbf16>, vector<64x128xf32> -> vector<64x128xf32>
    %c0_3 = arith.constant 0 : index
    %c0_4 = arith.constant 0 : index
    %3 = vector.load %arg3[%c0_3, %c0_4] : memref<1x128xf32, #tpu.memory_space<vmem>>, vector<1x128xf32>
    %4 = vector.broadcast %3 : vector<1x128xf32> to vector<64x128xf32>
    %5 = arith.addf %2, %4 : vector<64x128xf32>
    %cst_5 = arith.constant 0.000000e+00 : f32
    %6 = vector.broadcast %cst_5 : f32 to vector<64x128xf32>
    %7 = arith.cmpf oge, %5, %6 : vector<64x128xf32>
    %cst_6 = arith.constant 0.00999999977 : f32
    %8 = vector.broadcast %cst_6 : f32 to vector<64x128xf32>
    %9 = arith.mulf %8, %5 : vector<64x128xf32>
    %10 = arith.select %7, %5, %9 : vector<64x128xi1>, vector<64x128xf32>
    %c0_7 = arith.constant 0 : index
    %c0_8 = arith.constant 0 : index
    %11 = vector.load %arg4[%c0_7, %c0_8] : memref<64x128xf32, #tpu.memory_space<vmem>>, vector<64x128xf32>
    tpu.vector_store %arg4[%c0_7, %c0_8], %10 {strides = array<i32>} : memref<64x128xf32, #tpu.memory_space<vmem>>, vector<64x128xf32>,
    return
  }
  func.func @transform_0(%arg0: i32) -> (i32, i32) {
    %c0_i32 = arith.constant 0 : i32
    %c0_i32_0 = arith.constant 0 : i32
    return %arg0, %c0_i32 : i32, i32
  }
  func.func @transform_1(%arg0: i32) -> (i32, i32) {
    %c0_i32 = arith.constant 0 : i32
    %c0_i32_0 = arith.constant 0 : i32
    %c0_i32_1 = arith.constant 0 : i32
    return %c0_i32, %c0_i32_0 : i32, i32
  }
  func.func @transform_2(%arg0: i32) -> (i32, i32) {
    %c0_i32 = arith.constant 0 : i32
    %c0_i32_0 = arith.constant 0 : i32
    %c0_i32_1 = arith.constant 0 : i32
    return %c0_i32, %c0_i32_0 : i32, i32
  }
  func.func @transform_3(%arg0: i32) -> (i32, i32) {
    %c0_i32 = arith.constant 0 : i32
    %c0_i32_0 = arith.constant 0 : i32
    return %arg0, %c0_i32 : i32, i32
  }
}

module attributes {stable_mosaic.version = 11 : i64} {
  func.func @_head_kernel(%arg0: i32, %arg1: memref<2x512xbf16, #tpu.memory_space<vmem>>, %arg2: memref<512x32xbf16, #tpu.memory_space<vmem>>, %arg3: memref<1x32xf32, #tpu.memory_space<vmem>>, %arg4: memref<32x64xbf16, #tpu.memory_space<vmem>>, %arg5: memref<1x64xf32, #tpu.memory_space<vmem>>, %arg6: memref<64x128xbf16, #tpu.memory_space<vmem>>, %arg7: memref<1x128xf32, #tpu.memory_space<vmem>>, %arg8: memref<128x256xbf16, #tpu.memory_space<vmem>>, %arg9: memref<1x256xf32, #tpu.memory_space<vmem>>, %arg10: memref<2x32xf32, #tpu.memory_space<vmem>>, %arg11: memref<2x256xf32, #tpu.memory_space<vmem>>) attributes {dimension_semantics = [#tpu.dimension_semantics<arbitrary>], iteration_bounds = array<i64: 1>, scalar_prefetch = 0 : i64, scratch_operands = 0 : i64, tpu.core_type = #tpu.core_type<tc>, window_params = [{pipeline_mode = #tpu.pipeline_mode<synchronous>, transform_indices = @transform_0, window_bounds = array<i64: 2, 512>}, {pipeline_mode = #tpu.pipeline_mode<synchronous>, transform_indices = @transform_1, window_bounds = array<i64: 512, 32>}, {pipeline_mode = #tpu.pipeline_mode<synchronous>, transform_indices = @transform_2, window_bounds = array<i64: 1, 32>}, {pipeline_mode = #tpu.pipeline_mode<synchronous>, transform_indices = @transform_3, window_bounds = array<i64: 32, 64>}, {pipeline_mode = #tpu.pipeline_mode<synchronous>, transform_indices = @transform_4, window_bounds = array<i64: 1, 64>}, {pipeline_mode = #tpu.pipeline_mode<synchronous>, transform_indices = @transform_5, window_bounds = array<i64: 64, 128>}, {pipeline_mode = #tpu.pipeline_mode<synchronous>, transform_indices = @transform_6, window_bounds = array<i64: 1, 128>}, {pipeline_mode = #tpu.pipeline_mode<synchronous>, transform_indices = @transform_7, window_bounds = array<i64: 128, 256>}, {pipeline_mode = #tpu.pipeline_mode<synchronous>, transform_indices = @transform_8, window_bounds = array<i64: 1, 256>}, {pipeline_mode = #tpu.pipeline_mode<synchronous>, transform_indices = @transform_9, window_bounds = array<i64: 2, 32>}, {pipeline_mode = #tpu.pipeline_mode<synchronous>, transform_indices = @transform_10, window_bounds = array<i64: 2, 256>}]} {
    %c0 = arith.constant 0 : index
    %c0_0 = arith.constant 0 : index
    %0 = vector.load %arg1[%c0, %c0_0] : memref<2x512xbf16, #tpu.memory_space<vmem>>, vector<2x512xbf16>
    %c0_1 = arith.constant 0 : index
    %c0_2 = arith.constant 0 : index
    %1 = vector.load %arg2[%c0_1, %c0_2] : memref<512x32xbf16, #tpu.memory_space<vmem>>, vector<512x32xbf16>
    %cst = arith.constant dense<0.000000e+00> : vector<2x32xf32>
    %2 = tpu.matmul %0, %1, %cst {dimension_numbers = #tpu.dot_dimension_numbers<[1], [0], [0], [1], [0, 0, 1, 1], [], []>} : vector<2x512xbf16>, vector<512x32xbf16>, vector<2x32xf32> -> vector<2x32xf32>
    %c0_3 = arith.constant 0 : index
    %c0_4 = arith.constant 0 : index
    %3 = vector.load %arg3[%c0_3, %c0_4] : memref<1x32xf32, #tpu.memory_space<vmem>>, vector<1x32xf32>
    %4 = vector.broadcast %3 : vector<1x32xf32> to vector<2x32xf32>
    %5 = arith.addf %2, %4 : vector<2x32xf32>
    %c0_5 = arith.constant 0 : index
    %c0_6 = arith.constant 0 : index
    %6 = vector.load %arg10[%c0_5, %c0_6] : memref<2x32xf32, #tpu.memory_space<vmem>>, vector<2x32xf32>
    tpu.vector_store %arg10[%c0_5, %c0_6], %5 {strides = array<i32>} : memref<2x32xf32, #tpu.memory_space<vmem>>, vector<2x32xf32>,
    %7 = arith.truncf %5 : vector<2x32xf32> to vector<2x32xbf16>
    %c0_7 = arith.constant 0 : index
    %c0_8 = arith.constant 0 : index
    %8 = vector.load %arg4[%c0_7, %c0_8] : memref<32x64xbf16, #tpu.memory_space<vmem>>, vector<32x64xbf16>
    %cst_9 = arith.constant dense<0.000000e+00> : vector<2x64xf32>
    %9 = tpu.matmul %7, %8, %cst_9 {dimension_numbers = #tpu.dot_dimension_numbers<[1], [0], [0], [1], [0, 0, 1, 1], [], []>} : vector<2x32xbf16>, vector<32x64xbf16>, vector<2x64xf32> -> vector<2x64xf32>
    %c0_10 = arith.constant 0 : index
    %c0_11 = arith.constant 0 : index
    %10 = vector.load %arg5[%c0_10, %c0_11] : memref<1x64xf32, #tpu.memory_space<vmem>>, vector<1x64xf32>
    %11 = vector.broadcast %10 : vector<1x64xf32> to vector<2x64xf32>
    %12 = arith.addf %9, %11 : vector<2x64xf32>
    %cst_12 = arith.constant 0.000000e+00 : f32
    %13 = vector.broadcast %cst_12 : f32 to vector<2x64xf32>
    %14 = arith.cmpf oge, %12, %13 : vector<2x64xf32>
    %cst_13 = arith.constant 0.00999999977 : f32
    %15 = vector.broadcast %cst_13 : f32 to vector<2x64xf32>
    %16 = arith.mulf %15, %12 : vector<2x64xf32>
    %17 = arith.select %14, %12, %16 : vector<2x64xi1>, vector<2x64xf32>
    %18 = arith.truncf %17 : vector<2x64xf32> to vector<2x64xbf16>
    %c0_14 = arith.constant 0 : index
    %c0_15 = arith.constant 0 : index
    %19 = vector.load %arg6[%c0_14, %c0_15] : memref<64x128xbf16, #tpu.memory_space<vmem>>, vector<64x128xbf16>
    %cst_16 = arith.constant dense<0.000000e+00> : vector<2x128xf32>
    %20 = tpu.matmul %18, %19, %cst_16 {dimension_numbers = #tpu.dot_dimension_numbers<[1], [0], [0], [1], [0, 0, 1, 1], [], []>} : vector<2x64xbf16>, vector<64x128xbf16>, vector<2x128xf32> -> vector<2x128xf32>
    %c0_17 = arith.constant 0 : index
    %c0_18 = arith.constant 0 : index
    %21 = vector.load %arg7[%c0_17, %c0_18] : memref<1x128xf32, #tpu.memory_space<vmem>>, vector<1x128xf32>
    %22 = vector.broadcast %21 : vector<1x128xf32> to vector<2x128xf32>
    %23 = arith.addf %20, %22 : vector<2x128xf32>
    %cst_19 = arith.constant 0.000000e+00 : f32
    %24 = vector.broadcast %cst_19 : f32 to vector<2x128xf32>
    %25 = arith.cmpf oge, %23, %24 : vector<2x128xf32>
    %cst_20 = arith.constant 0.00999999977 : f32
    %26 = vector.broadcast %cst_20 : f32 to vector<2x128xf32>
    %27 = arith.mulf %26, %23 : vector<2x128xf32>
    %28 = arith.select %25, %23, %27 : vector<2x128xi1>, vector<2x128xf32>
    %29 = arith.truncf %28 : vector<2x128xf32> to vector<2x128xbf16>
    %c0_21 = arith.constant 0 : index
    %c0_22 = arith.constant 0 : index
    %30 = vector.load %arg8[%c0_21, %c0_22] : memref<128x256xbf16, #tpu.memory_space<vmem>>, vector<128x256xbf16>
    %cst_23 = arith.constant dense<0.000000e+00> : vector<2x256xf32>
    %31 = tpu.matmul %29, %30, %cst_23 {dimension_numbers = #tpu.dot_dimension_numbers<[1], [0], [0], [1], [0, 0, 1, 1], [], []>} : vector<2x128xbf16>, vector<128x256xbf16>, vector<2x256xf32> -> vector<2x256xf32>
    %c0_24 = arith.constant 0 : index
    %c0_25 = arith.constant 0 : index
    %32 = vector.load %arg9[%c0_24, %c0_25] : memref<1x256xf32, #tpu.memory_space<vmem>>, vector<1x256xf32>
    %33 = vector.broadcast %32 : vector<1x256xf32> to vector<2x256xf32>
    %34 = arith.addf %31, %33 : vector<2x256xf32>
    %cst_26 = arith.constant 0.000000e+00 : f32
    %35 = vector.broadcast %cst_26 : f32 to vector<2x256xf32>
    %36 = arith.cmpf oge, %34, %35 : vector<2x256xf32>
    %cst_27 = arith.constant 0.00999999977 : f32
    %37 = vector.broadcast %cst_27 : f32 to vector<2x256xf32>
    %38 = arith.mulf %37, %34 : vector<2x256xf32>
    %39 = arith.select %36, %34, %38 : vector<2x256xi1>, vector<2x256xf32>
    %c0_28 = arith.constant 0 : index
    %c0_29 = arith.constant 0 : index
    %40 = vector.load %arg11[%c0_28, %c0_29] : memref<2x256xf32, #tpu.memory_space<vmem>>, vector<2x256xf32>
    tpu.vector_store %arg11[%c0_28, %c0_29], %39 {strides = array<i32>} : memref<2x256xf32, #tpu.memory_space<vmem>>, vector<2x256xf32>,
    return
  }
  func.func @transform_0(%arg0: i32) -> (i32, i32) {
    %c0_i32 = arith.constant 0 : i32
    %c0_i32_0 = arith.constant 0 : i32
    %c0_i32_1 = arith.constant 0 : i32
    return %c0_i32, %c0_i32_0 : i32, i32
  }
  func.func @transform_1(%arg0: i32) -> (i32, i32) {
    %c0_i32 = arith.constant 0 : i32
    %c0_i32_0 = arith.constant 0 : i32
    %c0_i32_1 = arith.constant 0 : i32
    return %c0_i32, %c0_i32_0 : i32, i32
  }
  func.func @transform_2(%arg0: i32) -> (i32, i32) {
    %c0_i32 = arith.constant 0 : i32
    %c0_i32_0 = arith.constant 0 : i32
    %c0_i32_1 = arith.constant 0 : i32
    return %c0_i32, %c0_i32_0 : i32, i32
  }
  func.func @transform_3(%arg0: i32) -> (i32, i32) {
    %c0_i32 = arith.constant 0 : i32
    %c0_i32_0 = arith.constant 0 : i32
    %c0_i32_1 = arith.constant 0 : i32
    return %c0_i32, %c0_i32_0 : i32, i32
  }
  func.func @transform_4(%arg0: i32) -> (i32, i32) {
    %c0_i32 = arith.constant 0 : i32
    %c0_i32_0 = arith.constant 0 : i32
    %c0_i32_1 = arith.constant 0 : i32
    return %c0_i32, %c0_i32_0 : i32, i32
  }
  func.func @transform_5(%arg0: i32) -> (i32, i32) {
    %c0_i32 = arith.constant 0 : i32
    %c0_i32_0 = arith.constant 0 : i32
    %c0_i32_1 = arith.constant 0 : i32
    return %c0_i32, %c0_i32_0 : i32, i32
  }
  func.func @transform_6(%arg0: i32) -> (i32, i32) {
    %c0_i32 = arith.constant 0 : i32
    %c0_i32_0 = arith.constant 0 : i32
    %c0_i32_1 = arith.constant 0 : i32
    return %c0_i32, %c0_i32_0 : i32, i32
  }
  func.func @transform_7(%arg0: i32) -> (i32, i32) {
    %c0_i32 = arith.constant 0 : i32
    %c0_i32_0 = arith.constant 0 : i32
    %c0_i32_1 = arith.constant 0 : i32
    return %c0_i32, %c0_i32_0 : i32, i32
  }
  func.func @transform_8(%arg0: i32) -> (i32, i32) {
    %c0_i32 = arith.constant 0 : i32
    %c0_i32_0 = arith.constant 0 : i32
    %c0_i32_1 = arith.constant 0 : i32
    return %c0_i32, %c0_i32_0 : i32, i32
  }
  func.func @transform_9(%arg0: i32) -> (i32, i32) {
    %c0_i32 = arith.constant 0 : i32
    %c0_i32_0 = arith.constant 0 : i32
    %c0_i32_1 = arith.constant 0 : i32
    return %c0_i32, %c0_i32_0 : i32, i32
  }
  func.func @transform_10(%arg0: i32) -> (i32, i32) {
    %c0_i32 = arith.constant 0 : i32
    %c0_i32_0 = arith.constant 0 : i32
    %c0_i32_1 = arith.constant 0 : i32
    return %c0_i32, %c0_i32_0 : i32, i32
  }
}

</mosaic_0001>

<llo_original>
// kernel: forward.5
$region0: #{forward.5}
  #allocation0 [shape = 'u32[]', space=smem, size = 0x4, offset = 0x4, fixed_abs, tag = 'smem constant byte address 0x4 - core index']
  #allocation1 [shape = 'u32[72,128]{1,0:T(1,128)}', space=vmem, size = 0x9000, scoped, tag = 'internal scratch']
  %s0 = inlined_call_operand.vmem [shape: bf16[2240,16], index: 0, kind: input, shape index: {}]
  %s1 = inlined_call_operand.vmem [shape: bf16[16,128], index: 1, kind: input, shape index: {}]
  %s2 = inlined_call_operand.vmem [shape: f32[1,128], index: 2, kind: input, shape index: {}]
  %s3 = inlined_call_operand.vmem [shape: f32[2240,128], index: 3, kind: output, shape index: {}]
  %s4 = sld [smem:[#allocation0]]
  $region45: #{forward.5} parent=0
    _
  %s6 = ssub.s32 1, %s4
  %s7 = scalar_select 0, %s6, %s4
  loop: start=0, step=1, limit=7
  $region2: #{forward.5} parent=0 // loop_pre_header
    _
  $region3: #{forward.5} parent=0 // loop_header
    %s9 = sphi 0, %s13
    %p10 = scmp.ge.s32.totalorder %s9, 7
    %s19 = sphi 0, %s21
    %s22 = sphi 0, %s19
    %s23 = sphi 0, %s22
    %s39 = sphi 0, %s23
    %s43 = sphi 0, %s43
    %s45 = sphi 0, %s43
    %s46 = sphi 0, %s45
    %s60 = sphi 0, %s46
    %s64 = sphi 0, %s64
    %s66 = sphi 0, %s64
    %s67 = sphi 0, %s66
    %s81 = sphi 0, %s67
    %s87 = sphi 0, %s89
    %s90 = sphi 0, %s87
    %s91 = sphi 0, %s90
    %s107 = sphi 0, %s91
  $region4: #{forward.5} parent=0 // loop_header_branch
    %12 = sbr.rel (%p10) target = $region8
  $region5: #{forward.5} parent=0 // loop_body
    %s14 = ssub.s32 %s9, 1
    %s15 = ssub.s32 %s9, 2
    %s16 = sadd.s32 %s9, 1
    %s17 = ssub.s32 %s9, %s16
    %p18 = scmp.eq.s32.totalorder %s17, 0
    %s20 = sadd.s32 %s19, 1
    %s21 = scalar_select %p18, %s19, %s20
    %p24 = pneg %p18
    %p25 = scmp.eq.s32.totalorder %s9, 4
    %p26 = por %p24, %p25
    %p27 = scmp.ne.s32.totalorder %s19, %s22
    %p28 = scmp.eq.s32.totalorder %s9, 0
    %p29 = por %p27, %p28
    %p30 = scmp.ne.s32.totalorder %s19, %s22
    %p31 = scmp.eq.s32.totalorder %s14, 4
    %p32 = por %p30, %p31
    %p33 = scmp.ne.s32.totalorder %s22, %s23
    %p34 = scmp.eq.s32.totalorder %s14, 0
    %p35 = por %p33, %p34
    %p36 = scmp.ne.s32.totalorder %s22, %s23
    %p37 = scmp.eq.s32.totalorder %s15, 4
    %p38 = por %p36, %p37
    %p40 = scmp.ne.s32.totalorder %s23, %s39
    %p41 = scmp.eq.s32.totalorder %s15, 0
    %p42 = por %p40, %p41
    %s44 = sadd.s32 %s43, 1
    %p47 = scmp.eq.s32.totalorder %s9, 4
    %p48 = scmp.ne.s32.totalorder %s43, %s45
    %p49 = scmp.eq.s32.totalorder %s9, 0
    %p50 = por %p48, %p49
    %p51 = scmp.ne.s32.totalorder %s43, %s45
    %p52 = scmp.eq.s32.totalorder %s14, 4
    %p53 = por %p51, %p52
    %p54 = scmp.ne.s32.totalorder %s45, %s46
    %p55 = scmp.eq.s32.totalorder %s14, 0
    %p56 = por %p54, %p55
    %p57 = scmp.ne.s32.totalorder %s45, %s46
    %p58 = scmp.eq.s32.totalorder %s15, 4
    %p59 = por %p57, %p58
    %p61 = scmp.ne.s32.totalorder %s46, %s60
    %p62 = scmp.eq.s32.totalorder %s15, 0
    %p63 = por %p61, %p62
    %s65 = sadd.s32 %s64, 1
    %p68 = scmp.eq.s32.totalorder %s9, 4
    %p69 = scmp.ne.s32.totalorder %s64, %s66
    %p70 = scmp.eq.s32.totalorder %s9, 0
    %p71 = por %p69, %p70
    %p72 = scmp.ne.s32.totalorder %s64, %s66
    %p73 = scmp.eq.s32.totalorder %s14, 4
    %p74 = por %p72, %p73
    %p75 = scmp.ne.s32.totalorder %s66, %s67
    %p76 = scmp.eq.s32.totalorder %s14, 0
    %p77 = por %p75, %p76
    %p78 = scmp.ne.s32.totalorder %s66, %s67
    %p79 = scmp.eq.s32.totalorder %s15, 4
    %p80 = por %p78, %p79
    %p82 = scmp.ne.s32.totalorder %s67, %s81
    %p83 = scmp.eq.s32.totalorder %s15, 0
    %p84 = por %p82, %p83
    %s85 = ssub.s32 %s9, %s16
    %p86 = scmp.eq.s32.totalorder %s85, 0
    %s88 = sadd.s32 %s87, 1
    %s89 = scalar_select %p86, %s87, %s88
    %p92 = pneg %p86
    %p93 = scmp.eq.s32.totalorder %s9, 4
    %p94 = por %p92, %p93
    %p95 = scmp.ne.s32.totalorder %s87, %s90
    %p96 = scmp.eq.s32.totalorder %s9, 0
    %p97 = por %p95, %p96
    %p98 = scmp.ne.s32.totalorder %s87, %s90
    %p99 = scmp.eq.s32.totalorder %s14, 4
    %p100 = por %p98, %p99
    %p101 = scmp.ne.s32.totalorder %s90, %s91
    %p102 = scmp.eq.s32.totalorder %s14, 0
    %p103 = por %p101, %p102
    %p104 = scmp.ne.s32.totalorder %s90, %s91
    %p105 = scmp.eq.s32.totalorder %s15, 4
    %p106 = por %p104, %p105
    %p108 = scmp.ne.s32.totalorder %s91, %s107
    %p109 = scmp.eq.s32.totalorder %s15, 0
    %p110 = por %p108, %p109
    %p111 = scmp.le.s32.totalorder 1, %s9
    %p112 = scmp.lt.s32.totalorder %s9, 6
    %p113 = pnand %p111, %p112
    %p114 = pneg %p113
    // Predicated region
    $region9: #{forward.5} parent=5 // pred_check
      _
    $region10: #{forward.5} parent=5 // pred_check_branch
      %116 = sbr.rel (%p113) target = $region12
    $region11: #{forward.5} parent=5 // pred_region
      %s117 = ssub.s32 %s9, 1
      // Predicated region
      $region13: #{forward.5} parent=11 // pred_check
        %p118 = pneg %p56
      $region14: #{forward.5} parent=11 // pred_check_branch
        %120 = sbr.rel (%p118) target = $region16
      $region15: #{forward.5} parent=11 // pred_region
        _
      $region16: #{forward.5} parent=11 // pred_fallthru
        _
      // Predicated region
      $region17: #{forward.5} parent=11 // pred_check
        %p121 = pneg %p77
      $region18: #{forward.5} parent=11 // pred_check_branch
        %123 = sbr.rel (%p121) target = $region20
      $region19: #{forward.5} parent=11 // pred_region
        _
      $region20: #{forward.5} parent=11 // pred_fallthru
        _
    $region12: #{forward.5} parent=5 // pred_fallthru
      _
    %p124 = scmp.lt.s32.totalorder %s9, 5
    // Predicated region
    $region21: #{forward.5} parent=5 // pred_check
      %p125 = pneg %p124
    $region22: #{forward.5} parent=5 // pred_check_branch
      %127 = sbr.rel (%p125) target = $region24
    $region23: #{forward.5} parent=5 // pred_region
      // Predicated region
      $region25: #{forward.5} parent=23 // pred_check
        %p128 = pneg %p29
      $region26: #{forward.5} parent=23 // pred_check_branch
        %130 = sbr.rel (%p128) target = $region28
      $region27: #{forward.5} parent=23 // pred_region
        %s131 = smul.u32 56, %s9
        %p132 = scmp.lt.s32.totalorder %s131, 279
        %s133 = scalar_select %p132, %s131, 279
        %s134 = smul.addr %s133, 4
        %s135 = scalar_lea.vmem %s0, %s134
        %s136 = smul.u32 56, %s9
      $region28: #{forward.5} parent=23 // pred_fallthru
        _
    $region24: #{forward.5} parent=5 // pred_fallthru
      _
    %p137 = scmp.le.s32.totalorder 1, %s9
    %p138 = scmp.lt.s32.totalorder %s9, 6
    %p139 = pnand %p137, %p138
    %p140 = pneg %p139
    // Predicated region
    $region29: #{forward.5} parent=5 // pred_check
      _
    $region30: #{forward.5} parent=5 // pred_check_branch
      %142 = sbr.rel (%p139) target = $region32
    $region31: #{forward.5} parent=5 // pred_region
      %s143 = ssub.s32 %s9, 1
      %s144 = smul.u32 56, %s14
      %p145 = scmp.lt.s32.totalorder %s144, 279
      %s146 = scalar_select %p145, %s144, 279
      %s147 = smul.addr %s146, 4
      %s148 = scalar_lea.vmem %s0, %s147
      %p149 = pneg %p35
      %p150 = pneg %p32
      %p151 = pneg %p56
      %p152 = pneg %p53
      %p153 = pneg %p77
      %p154 = pneg %p74
      %p155 = pneg %p103
      %p156 = pneg %p100
      %s157 = smul.u32 56, %s14
      %p158 = scmp.lt.s32.totalorder %s157, 279
      %s159 = scalar_select %p158, %s157, 279
      %s160 = smul.addr %s159, 8
      %s161 = scalar_lea.vmem %s3, %s160
      %s162 = smul.u32 56, %s14
      %p163 = scmp.lt.s32.totalorder %s162, 279
      %s164 = scalar_select %p163, %s162, 279
      %s165 = smul.addr %s164, 4
      %s166 = scalar_lea.vmem %s0, %s165
      %s167 = smul.u32 56, %s14
      %s168 = smul.u32 56, %s14
      %p169 = scmp.lt.s32.totalorder %s168, 279
      %s170 = scalar_select %p169, %s168, 279
      %s171 = smul.addr %s170, 8
      %s172 = scalar_lea.vmem %s3, %s171
      %s173 = smul.u32 56, %s14
      %v175 = vld [vmem:[%s166] sm:$0xf]
      %v176 = vld [vmem:[%s166 + $0x4] sm:$0xf]
      %v177 = vld [vmem:[%s166 + $0x8] sm:$0xf]
      %v178 = vld [vmem:[%s166 + $0xc] sm:$0xf]
      %v179 = vld [vmem:[%s166 + $0x10] sm:$0xf]
      %v180 = vld [vmem:[%s166 + $0x14] sm:$0xf]
      %v181 = vld [vmem:[%s166 + $0x18] sm:$0xf]
      %v182 = vld [vmem:[%s166 + $0x1c] sm:$0xf]
      %v183 = vld [vmem:[%s166 + $0x20] sm:$0xf]
      %v184 = vld [vmem:[%s166 + $0x24] sm:$0xf]
      %v185 = vld [vmem:[%s166 + $0x28] sm:$0xf]
      %v186 = vld [vmem:[%s166 + $0x2c] sm:$0xf]
      %v187 = vld [vmem:[%s166 + $0x30] sm:$0xf]
      %v188 = vld [vmem:[%s166 + $0x34] sm:$0xf]
      %v189 = vld [vmem:[%s166 + $0x38] sm:$0xf]
      %v190 = vld [vmem:[%s166 + $0x3c] sm:$0xf]
      %v191 = vld [vmem:[%s166 + $0x40] sm:$0xf]
      %v192 = vld [vmem:[%s166 + $0x44] sm:$0xf]
      %v193 = vld [vmem:[%s166 + $0x48] sm:$0xf]
      %v194 = vld [vmem:[%s166 + $0x4c] sm:$0xf]
      %v195 = vld [vmem:[%s166 + $0x50] sm:$0xf]
      %v196 = vld [vmem:[%s166 + $0x54] sm:$0xf]
      %v197 = vld [vmem:[%s166 + $0x58] sm:$0xf]
      %v198 = vld [vmem:[%s166 + $0x5c] sm:$0xf]
      %v199 = vld [vmem:[%s166 + $0x60] sm:$0xf]
      %v200 = vld [vmem:[%s166 + $0x64] sm:$0xf]
      %v201 = vld [vmem:[%s166 + $0x68] sm:$0xf]
      %v202 = vld [vmem:[%s166 + $0x6c] sm:$0xf]
      %v203 = vld [vmem:[%s166 + $0x70] sm:$0xf]
      %v204 = vld [vmem:[%s166 + $0x74] sm:$0xf]
      %v205 = vld [vmem:[%s166 + $0x78] sm:$0xf]
      %v206 = vld [vmem:[%s166 + $0x7c] sm:$0xf]
      %v207 = vld [vmem:[%s166 + $0x80] sm:$0xf]
      %v208 = vld [vmem:[%s166 + $0x84] sm:$0xf]
      %v209 = vld [vmem:[%s166 + $0x88] sm:$0xf]
      %v210 = vld [vmem:[%s166 + $0x8c] sm:$0xf]
      %v211 = vld [vmem:[%s166 + $0x90] sm:$0xf]
      %v212 = vld [vmem:[%s166 + $0x94] sm:$0xf]
      %v213 = vld [vmem:[%s166 + $0x98] sm:$0xf]
      %v214 = vld [vmem:[%s166 + $0x9c] sm:$0xf]
      %v215 = vld [vmem:[%s166 + $0xa0] sm:$0xf]
      %v216 = vld [vmem:[%s166 + $0xa4] sm:$0xf]
      %v217 = vld [vmem:[%s166 + $0xa8] sm:$0xf]
      %v218 = vld [vmem:[%s166 + $0xac] sm:$0xf]
      %v219 = vld [vmem:[%s166 + $0xb0] sm:$0xf]
      %v220 = vld [vmem:[%s166 + $0xb4] sm:$0xf]
      %v221 = vld [vmem:[%s166 + $0xb8] sm:$0xf]
      %v222 = vld [vmem:[%s166 + $0xbc] sm:$0xf]
      %v223 = vld [vmem:[%s166 + $0xc0] sm:$0xf]
      %v224 = vld [vmem:[%s166 + $0xc4] sm:$0xf]
      %v225 = vld [vmem:[%s166 + $0xc8] sm:$0xf]
      %v226 = vld [vmem:[%s166 + $0xcc] sm:$0xf]
      %v227 = vld [vmem:[%s166 + $0xd0] sm:$0xf]
      %v228 = vld [vmem:[%s166 + $0xd4] sm:$0xf]
      %v229 = vld [vmem:[%s166 + $0xd8] sm:$0xf]
      %v230 = vld [vmem:[%s166 + $0xdc] sm:$0xf]
      %v231 = vld [vmem:[%s1] sm:$0xf]
      %v232 = vld [vmem:[%s1 + $0x4] sm:$0xf]
      %v233 = vld [vmem:[%s2] sm:$0x1]
      %v235 = vperm.slane %v233, 0
      %v293 = vunpack.c.l.b16 %v175
      %v294 = vunpack.c.l.b16 %v176
      %v295 = vunpack.c.l.b16 %v177
      %v296 = vunpack.c.l.b16 %v178
      %v297 = vunpack.c.l.b16 %v179
      %v298 = vunpack.c.l.b16 %v180
      %v299 = vunpack.c.l.b16 %v181
      %v300 = vunpack.c.l.b16 %v182
      %v301 = vunpack.c.l.b16 %v183
      %v302 = vunpack.c.l.b16 %v184
      %v303 = vunpack.c.l.b16 %v185
      %v304 = vunpack.c.l.b16 %v186
      %v305 = vunpack.c.l.b16 %v187
      %v306 = vunpack.c.l.b16 %v188
      %v307 = vunpack.c.l.b16 %v189
      %v308 = vunpack.c.l.b16 %v190
      %v309 = vunpack.c.l.b16 %v191
      %v310 = vunpack.c.l.b16 %v192
      %v311 = vunpack.c.l.b16 %v193
      %v312 = vunpack.c.l.b16 %v194
      %v313 = vunpack.c.l.b16 %v195
      %v314 = vunpack.c.l.b16 %v196
      %v315 = vunpack.c.l.b16 %v197
      %v316 = vunpack.c.l.b16 %v198
      %v317 = vunpack.c.l.b16 %v199
      %v318 = vunpack.c.l.b16 %v200
      %v319 = vunpack.c.l.b16 %v201
      %v320 = vunpack.c.l.b16 %v202
      %v321 = vunpack.c.l.b16 %v203
      %v322 = vunpack.c.l.b16 %v204
      %v323 = vunpack.c.l.b16 %v205
      %v324 = vunpack.c.l.b16 %v206
      %v325 = vunpack.c.l.b16 %v207
      %v326 = vunpack.c.l.b16 %v208
      %v327 = vunpack.c.l.b16 %v209
      %v328 = vunpack.c.l.b16 %v210
      %v329 = vunpack.c.l.b16 %v211
      %v330 = vunpack.c.l.b16 %v212
      %v331 = vunpack.c.l.b16 %v213
      %v332 = vunpack.c.l.b16 %v214
      %v333 = vunpack.c.l.b16 %v215
      %v334 = vunpack.c.l.b16 %v216
      %v335 = vunpack.c.l.b16 %v217
      %v336 = vunpack.c.l.b16 %v218
      %v337 = vunpack.c.l.b16 %v219
      %v338 = vunpack.c.l.b16 %v220
      %v339 = vunpack.c.l.b16 %v221
      %v340 = vunpack.c.l.b16 %v222
      %v341 = vunpack.c.l.b16 %v223
      %v342 = vunpack.c.l.b16 %v224
      %v343 = vunpack.c.l.b16 %v225
      %v344 = vunpack.c.l.b16 %v226
      %v345 = vunpack.c.l.b16 %v227
      %v346 = vunpack.c.l.b16 %v228
      %v347 = vunpack.c.l.b16 %v229
      %v348 = vunpack.c.l.b16 %v230
      %v349 = vpack.c.b16 %v294, %v293
      %v350 = vpack.c.b16 %v296, %v295
      %v351 = vpack.c.b16 %v298, %v297
      %v352 = vpack.c.b16 %v300, %v299
      %v353 = vpack.c.b16 %v302, %v301
      %v354 = vpack.c.b16 %v304, %v303
      %v355 = vpack.c.b16 %v306, %v305
      %v356 = vpack.c.b16 %v308, %v307
      %v357 = vpack.c.b16 %v310, %v309
      %v358 = vpack.c.b16 %v312, %v311
      %v359 = vpack.c.b16 %v314, %v313
      %v360 = vpack.c.b16 %v316, %v315
      %v361 = vpack.c.b16 %v318, %v317
      %v362 = vpack.c.b16 %v320, %v319
      %v363 = vpack.c.b16 %v322, %v321
      %v364 = vpack.c.b16 %v324, %v323
      %v365 = vpack.c.b16 %v326, %v325
      %v366 = vpack.c.b16 %v328, %v327
      %v367 = vpack.c.b16 %v330, %v329
      %v368 = vpack.c.b16 %v332, %v331
      %v369 = vpack.c.b16 %v334, %v333
      %v370 = vpack.c.b16 %v336, %v335
      %v371 = vpack.c.b16 %v338, %v337
      %v372 = vpack.c.b16 %v340, %v339
      %v373 = vpack.c.b16 %v342, %v341
      %v374 = vpack.c.b16 %v344, %v343
      %v375 = vpack.c.b16 %v346, %v345
      %v376 = vpack.c.b16 %v348, %v347
      %v379 = vunpack.c.l.b16 %v231
      %v380 = vunpack.c.l.b16 %v232
      %v381 = vpack.c.b16 %v380, %v379
      %vm383 = vcmask 130048
      %v385 = vsel %vm383, %v349, 0
      %v388 = vsel %vm383, %v350, 0
      %v391 = vsel %vm383, %v351, 0
      %v394 = vsel %vm383, %v352, 0
      %v397 = vsel %vm383, %v353, 0
      %v400 = vsel %vm383, %v354, 0
      %v403 = vsel %vm383, %v355, 0
      %v406 = vsel %vm383, %v356, 0
      %v409 = vsel %vm383, %v357, 0
      %v412 = vsel %vm383, %v358, 0
      %v415 = vsel %vm383, %v359, 0
      %v418 = vsel %vm383, %v360, 0
      %v421 = vsel %vm383, %v361, 0
      %v424 = vsel %vm383, %v362, 0
      %v427 = vsel %vm383, %v363, 0
      %v430 = vsel %vm383, %v364, 0
      %v433 = vsel %vm383, %v365, 0
      %v436 = vsel %vm383, %v366, 0
      %v439 = vsel %vm383, %v367, 0
      %v442 = vsel %vm383, %v368, 0
      %v445 = vsel %vm383, %v369, 0
      %v448 = vsel %vm383, %v370, 0
      %v451 = vsel %vm383, %v371, 0
      %v454 = vsel %vm383, %v372, 0
      %v457 = vsel %vm383, %v373, 0
      %v460 = vsel %vm383, %v374, 0
      %v463 = vsel %vm383, %v375, 0
      %v466 = vsel %vm383, %v376, 0
      %468 = vmatpush.bf16.msra.mxu0 0
      %469 = vmatpush.bf16.msra.mxu0 0
      %470 = vmatpush.bf16.msra.mxu0 0
      %471 = vmatpush.bf16.msra.mxu0 0
      %472 = vmatpush.bf16.msra.mxu0 0
      %473 = vmatpush.bf16.msra.mxu0 0
      %474 = vmatpush.bf16.msra.mxu0 0
      %475 = vmatpush.bf16.msra.mxu0 %v381
      %476 = vmatmul.bf16.gmra.mxu0 %v385
      %v477 = vpop.f32.mrf.mxu0
      %v478 = vadd.f32 %v235, %v477
      %v479 = vpop.f32.mrf.mxu0
      %v480 = vadd.f32 %v235, %v479
      %481 = vmatmul.bf16.gmra.mxu0 %v388
      %v482 = vpop.f32.mrf.mxu0
      %v483 = vadd.f32 %v235, %v482
      %v484 = vpop.f32.mrf.mxu0
      %v485 = vadd.f32 %v235, %v484
      %486 = vmatmul.bf16.gmra.mxu0 %v391
      %v487 = vpop.f32.mrf.mxu0
      %v488 = vadd.f32 %v235, %v487
      %v489 = vpop.f32.mrf.mxu0
      %v490 = vadd.f32 %v235, %v489
      %491 = vmatmul.bf16.gmra.mxu0 %v394
      %v492 = vpop.f32.mrf.mxu0
      %v493 = vadd.f32 %v235, %v492
      %v494 = vpop.f32.mrf.mxu0
      %v495 = vadd.f32 %v235, %v494
      %496 = vmatmul.bf16.gmra.mxu0 %v397
      %v497 = vpop.f32.mrf.mxu0
      %v498 = vadd.f32 %v235, %v497
      %v499 = vpop.f32.mrf.mxu0
      %v500 = vadd.f32 %v235, %v499
      %501 = vmatmul.bf16.gmra.mxu0 %v400
      %v502 = vpop.f32.mrf.mxu0
      %v503 = vadd.f32 %v235, %v502
      %v504 = vpop.f32.mrf.mxu0
      %v505 = vadd.f32 %v235, %v504
      %506 = vmatmul.bf16.gmra.mxu0 %v403
      %v507 = vpop.f32.mrf.mxu0
      %v508 = vadd.f32 %v235, %v507
      %v509 = vpop.f32.mrf.mxu0
      %v510 = vadd.f32 %v235, %v509
      %511 = vmatmul.bf16.gmra.mxu0 %v406
      %v512 = vpop.f32.mrf.mxu0
      %v513 = vadd.f32 %v235, %v512
      %v514 = vpop.f32.mrf.mxu0
      %v515 = vadd.f32 %v235, %v514
      %516 = vmatmul.bf16.gmra.mxu0 %v409
      %v517 = vpop.f32.mrf.mxu0
      %v518 = vadd.f32 %v235, %v517
      %v519 = vpop.f32.mrf.mxu0
      %v520 = vadd.f32 %v235, %v519
      %521 = vmatmul.bf16.gmra.mxu0 %v412
      %v522 = vpop.f32.mrf.mxu0
      %v523 = vadd.f32 %v235, %v522
      %v524 = vpop.f32.mrf.mxu0
      %v525 = vadd.f32 %v235, %v524
      %526 = vmatmul.bf16.gmra.mxu0 %v415
      %v527 = vpop.f32.mrf.mxu0
      %v528 = vadd.f32 %v235, %v527
      %v529 = vpop.f32.mrf.mxu0
      %v530 = vadd.f32 %v235, %v529
      %531 = vmatmul.bf16.gmra.mxu0 %v418
      %v532 = vpop.f32.mrf.mxu0
      %v533 = vadd.f32 %v235, %v532
      %v534 = vpop.f32.mrf.mxu0
      %v535 = vadd.f32 %v235, %v534
      %536 = vmatmul.bf16.gmra.mxu0 %v421
      %v537 = vpop.f32.mrf.mxu0
      %v538 = vadd.f32 %v235, %v537
      %v539 = vpop.f32.mrf.mxu0
      %v540 = vadd.f32 %v235, %v539
      %541 = vmatmul.bf16.gmra.mxu0 %v424
      %v542 = vpop.f32.mrf.mxu0
      %v543 = vadd.f32 %v235, %v542
      %v544 = vpop.f32.mrf.mxu0
      %v545 = vadd.f32 %v235, %v544
      %546 = vmatmul.bf16.gmra.mxu0 %v427
      %v547 = vpop.f32.mrf.mxu0
      %v548 = vadd.f32 %v235, %v547
      %v549 = vpop.f32.mrf.mxu0
      %v550 = vadd.f32 %v235, %v549
      %551 = vmatmul.bf16.gmra.mxu0 %v430
      %v552 = vpop.f32.mrf.mxu0
      %v553 = vadd.f32 %v235, %v552
      %v554 = vpop.f32.mrf.mxu0
      %v555 = vadd.f32 %v235, %v554
      %556 = vmatmul.bf16.gmra.mxu0 %v433
      %v557 = vpop.f32.mrf.mxu0
      %v558 = vadd.f32 %v235, %v557
      %v559 = vpop.f32.mrf.mxu0
      %v560 = vadd.f32 %v235, %v559
      %561 = vmatmul.bf16.gmra.mxu0 %v436
      %v562 = vpop.f32.mrf.mxu0
      %v563 = vadd.f32 %v235, %v562
      %v564 = vpop.f32.mrf.mxu0
      %v565 = vadd.f32 %v235, %v564
      %566 = vmatmul.bf16.gmra.mxu0 %v439
      %v567 = vpop.f32.mrf.mxu0
      %v568 = vadd.f32 %v235, %v567
      %v569 = vpop.f32.mrf.mxu0
      %v570 = vadd.f32 %v235, %v569
      %571 = vmatmul.bf16.gmra.mxu0 %v442
      %v572 = vpop.f32.mrf.mxu0
      %v573 = vadd.f32 %v235, %v572
      %v574 = vpop.f32.mrf.mxu0
      %v575 = vadd.f32 %v235, %v574
      %576 = vmatmul.bf16.gmra.mxu0 %v445
      %v577 = vpop.f32.mrf.mxu0
      %v578 = vadd.f32 %v235, %v577
      %v579 = vpop.f32.mrf.mxu0
      %v580 = vadd.f32 %v235, %v579
      %581 = vmatmul.bf16.gmra.mxu0 %v448
      %v582 = vpop.f32.mrf.mxu0
      %v583 = vadd.f32 %v235, %v582
      %v584 = vpop.f32.mrf.mxu0
      %v585 = vadd.f32 %v235, %v584
      %586 = vmatmul.bf16.gmra.mxu0 %v451
      %v587 = vpop.f32.mrf.mxu0
      %v588 = vadd.f32 %v235, %v587
      %v589 = vpop.f32.mrf.mxu0
      %v590 = vadd.f32 %v235, %v589
      %591 = vmatmul.bf16.gmra.mxu0 %v454
      %v592 = vpop.f32.mrf.mxu0
      %v593 = vadd.f32 %v235, %v592
      %v594 = vpop.f32.mrf.mxu0
      %v595 = vadd.f32 %v235, %v594
      %596 = vmatmul.bf16.gmra.mxu0 %v457
      %v597 = vpop.f32.mrf.mxu0
      %v598 = vadd.f32 %v235, %v597
      %v599 = vpop.f32.mrf.mxu0
      %v600 = vadd.f32 %v235, %v599
      %601 = vmatmul.bf16.gmra.mxu0 %v460
      %v602 = vpop.f32.mrf.mxu0
      %v603 = vadd.f32 %v235, %v602
      %v604 = vpop.f32.mrf.mxu0
      %v605 = vadd.f32 %v235, %v604
      %606 = vmatmul.bf16.gmra.mxu0 %v463
      %v607 = vpop.f32.mrf.mxu0
      %v608 = vadd.f32 %v235, %v607
      %v609 = vpop.f32.mrf.mxu0
      %v610 = vadd.f32 %v235, %v609
      %611 = vmatmul.bf16.gmra.mxu0 %v466
      %v612 = vpop.f32.mrf.mxu0
      %v613 = vadd.f32 %v235, %v612
      %v614 = vpop.f32.mrf.mxu0
      %v615 = vadd.f32 %v235, %v614
      %616 = vdwg.mxu0
      %vm617 = vcmp.ge.f32.partialorder %v478, 0.0
      %vm618 = vcmp.ge.f32.partialorder %v480, 0.0
      %vm619 = vcmp.ge.f32.partialorder %v483, 0.0
      %vm620 = vcmp.ge.f32.partialorder %v485, 0.0
      %vm621 = vcmp.ge.f32.partialorder %v488, 0.0
      %vm622 = vcmp.ge.f32.partialorder %v490, 0.0
      %vm623 = vcmp.ge.f32.partialorder %v493, 0.0
      %vm624 = vcmp.ge.f32.partialorder %v495, 0.0
      %vm625 = vcmp.ge.f32.partialorder %v498, 0.0
      %vm626 = vcmp.ge.f32.partialorder %v500, 0.0
      %vm627 = vcmp.ge.f32.partialorder %v503, 0.0
      %vm628 = vcmp.ge.f32.partialorder %v505, 0.0
      %vm629 = vcmp.ge.f32.partialorder %v508, 0.0
      %vm630 = vcmp.ge.f32.partialorder %v510, 0.0
      %vm631 = vcmp.ge.f32.partialorder %v513, 0.0
      %vm632 = vcmp.ge.f32.partialorder %v515, 0.0
      %vm633 = vcmp.ge.f32.partialorder %v518, 0.0
      %vm634 = vcmp.ge.f32.partialorder %v520, 0.0
      %vm635 = vcmp.ge.f32.partialorder %v523, 0.0
      %vm636 = vcmp.ge.f32.partialorder %v525, 0.0
      %vm637 = vcmp.ge.f32.partialorder %v528, 0.0
      %vm638 = vcmp.ge.f32.partialorder %v530, 0.0
      %vm639 = vcmp.ge.f32.partialorder %v533, 0.0
      %vm640 = vcmp.ge.f32.partialorder %v535, 0.0
      %vm641 = vcmp.ge.f32.partialorder %v538, 0.0
      %vm642 = vcmp.ge.f32.partialorder %v540, 0.0
      %vm643 = vcmp.ge.f32.partialorder %v543, 0.0
      %vm644 = vcmp.ge.f32.partialorder %v545, 0.0
      %vm645 = vcmp.ge.f32.partialorder %v548, 0.0
      %vm646 = vcmp.ge.f32.partialorder %v550, 0.0
      %vm647 = vcmp.ge.f32.partialorder %v553, 0.0
      %vm648 = vcmp.ge.f32.partialorder %v555, 0.0
      %vm649 = vcmp.ge.f32.partialorder %v558, 0.0
      %vm650 = vcmp.ge.f32.partialorder %v560, 0.0
      %vm651 = vcmp.ge.f32.partialorder %v563, 0.0
      %vm652 = vcmp.ge.f32.partialorder %v565, 0.0
      %vm653 = vcmp.ge.f32.partialorder %v568, 0.0
      %vm654 = vcmp.ge.f32.partialorder %v570, 0.0
      %vm655 = vcmp.ge.f32.partialorder %v573, 0.0
      %vm656 = vcmp.ge.f32.partialorder %v575, 0.0
      %vm657 = vcmp.ge.f32.partialorder %v578, 0.0
      %vm658 = vcmp.ge.f32.partialorder %v580, 0.0
      %vm659 = vcmp.ge.f32.partialorder %v583, 0.0
      %vm660 = vcmp.ge.f32.partialorder %v585, 0.0
      %vm661 = vcmp.ge.f32.partialorder %v588, 0.0
      %vm662 = vcmp.ge.f32.partialorder %v590, 0.0
      %vm663 = vcmp.ge.f32.partialorder %v593, 0.0
      %vm664 = vcmp.ge.f32.partialorder %v595, 0.0
      %vm665 = vcmp.ge.f32.partialorder %v598, 0.0
      %vm666 = vcmp.ge.f32.partialorder %v600, 0.0
      %vm667 = vcmp.ge.f32.partialorder %v603, 0.0
      %vm668 = vcmp.ge.f32.partialorder %v605, 0.0
      %vm669 = vcmp.ge.f32.partialorder %v608, 0.0
      %vm670 = vcmp.ge.f32.partialorder %v610, 0.0
      %vm671 = vcmp.ge.f32.partialorder %v613, 0.0
      %vm672 = vcmp.ge.f32.partialorder %v615, 0.0
      %v673 = vmul.f32 %v478, 0.01
      %v674 = vmul.f32 %v480, 0.01
      %v675 = vmul.f32 %v483, 0.01
      %v676 = vmul.f32 %v485, 0.01
      %v677 = vmul.f32 %v488, 0.01
      %v678 = vmul.f32 %v490, 0.01
      %v679 = vmul.f32 %v493, 0.01
      %v680 = vmul.f32 %v495, 0.01
      %v681 = vmul.f32 %v498, 0.01
      %v682 = vmul.f32 %v500, 0.01
      %v683 = vmul.f32 %v503, 0.01
      %v684 = vmul.f32 %v505, 0.01
      %v685 = vmul.f32 %v508, 0.01
      %v686 = vmul.f32 %v510, 0.01
      %v687 = vmul.f32 %v513, 0.01
      %v688 = vmul.f32 %v515, 0.01
      %v689 = vmul.f32 %v518, 0.01
      %v690 = vmul.f32 %v520, 0.01
      %v691 = vmul.f32 %v523, 0.01
      %v692 = vmul.f32 %v525, 0.01
      %v693 = vmul.f32 %v528, 0.01
      %v694 = vmul.f32 %v530, 0.01
      %v695 = vmul.f32 %v533, 0.01
      %v696 = vmul.f32 %v535, 0.01
      %v697 = vmul.f32 %v538, 0.01
      %v698 = vmul.f32 %v540, 0.01
      %v699 = vmul.f32 %v543, 0.01
      %v700 = vmul.f32 %v545, 0.01
      %v701 = vmul.f32 %v548, 0.01
      %v702 = vmul.f32 %v550, 0.01
      %v703 = vmul.f32 %v553, 0.01
      %v704 = vmul.f32 %v555, 0.01
      %v705 = vmul.f32 %v558, 0.01
      %v706 = vmul.f32 %v560, 0.01
      %v707 = vmul.f32 %v563, 0.01
      %v708 = vmul.f32 %v565, 0.01
      %v709 = vmul.f32 %v568, 0.01
      %v710 = vmul.f32 %v570, 0.01
      %v711 = vmul.f32 %v573, 0.01
      %v712 = vmul.f32 %v575, 0.01
      %v713 = vmul.f32 %v578, 0.01
      %v714 = vmul.f32 %v580, 0.01
      %v715 = vmul.f32 %v583, 0.01
      %v716 = vmul.f32 %v585, 0.01
      %v717 = vmul.f32 %v588, 0.01
      %v718 = vmul.f32 %v590, 0.01
      %v719 = vmul.f32 %v593, 0.01
      %v720 = vmul.f32 %v595, 0.01
      %v721 = vmul.f32 %v598, 0.01
      %v722 = vmul.f32 %v600, 0.01
      %v723 = vmul.f32 %v603, 0.01
      %v724 = vmul.f32 %v605, 0.01
      %v725 = vmul.f32 %v608, 0.01
      %v726 = vmul.f32 %v610, 0.01
      %v727 = vmul.f32 %v613, 0.01
      %v728 = vmul.f32 %v615, 0.01
      %v729 = vsel %vm617, %v478, %v673
      %v730 = vsel %vm618, %v480, %v674
      %v731 = vsel %vm619, %v483, %v675
      %v732 = vsel %vm620, %v485, %v676
      %v733 = vsel %vm621, %v488, %v677
      %v734 = vsel %vm622, %v490, %v678
      %v735 = vsel %vm623, %v493, %v679
      %v736 = vsel %vm624, %v495, %v680
      %v737 = vsel %vm625, %v498, %v681
      %v738 = vsel %vm626, %v500, %v682
      %v739 = vsel %vm627, %v503, %v683
      %v740 = vsel %vm628, %v505, %v684
      %v741 = vsel %vm629, %v508, %v685
      %v742 = vsel %vm630, %v510, %v686
      %v743 = vsel %vm631, %v513, %v687
      %v744 = vsel %vm632, %v515, %v688
      %v745 = vsel %vm633, %v518, %v689
      %v746 = vsel %vm634, %v520, %v690
      %v747 = vsel %vm635, %v523, %v691
      %v748 = vsel %vm636, %v525, %v692
      %v749 = vsel %vm637, %v528, %v693
      %v750 = vsel %vm638, %v530, %v694
      %v751 = vsel %vm639, %v533, %v695
      %v752 = vsel %vm640, %v535, %v696
      %v753 = vsel %vm641, %v538, %v697
      %v754 = vsel %vm642, %v540, %v698
      %v755 = vsel %vm643, %v543, %v699
      %v756 = vsel %vm644, %v545, %v700
      %v757 = vsel %vm645, %v548, %v701
      %v758 = vsel %vm646, %v550, %v702
      %v759 = vsel %vm647, %v553, %v703
      %v760 = vsel %vm648, %v555, %v704
      %v761 = vsel %vm649, %v558, %v705
      %v762 = vsel %vm650, %v560, %v706
      %v763 = vsel %vm651, %v563, %v707
      %v764 = vsel %vm652, %v565, %v708
      %v765 = vsel %vm653, %v568, %v709
      %v766 = vsel %vm654, %v570, %v710
      %v767 = vsel %vm655, %v573, %v711
      %v768 = vsel %vm656, %v575, %v712
      %v769 = vsel %vm657, %v578, %v713
      %v770 = vsel %vm658, %v580, %v714
      %v771 = vsel %vm659, %v583, %v715
      %v772 = vsel %vm660, %v585, %v716
      %v773 = vsel %vm661, %v588, %v717
      %v774 = vsel %vm662, %v590, %v718
      %v775 = vsel %vm663, %v593, %v719
      %v776 = vsel %vm664, %v595, %v720
      %v777 = vsel %vm665, %v598, %v721
      %v778 = vsel %vm666, %v600, %v722
      %v779 = vsel %vm667, %v603, %v723
      %v780 = vsel %vm668, %v605, %v724
      %v781 = vsel %vm669, %v608, %v725
      %v782 = vsel %vm670, %v610, %v726
      %v783 = vsel %vm671, %v613, %v727
      %v784 = vsel %vm672, %v615, %v728
      %785 = vst [vmem:[%s172] sm:$0xff] %v729
      %786 = vst [vmem:[%s172 + $0x8] sm:$0xff] %v730
      %787 = vst [vmem:[%s172 + $0x10] sm:$0xff] %v731
      %788 = vst [vmem:[%s172 + $0x18] sm:$0xff] %v732
      %789 = vst [vmem:[%s172 + $0x20] sm:$0xff] %v733
      %790 = vst [vmem:[%s172 + $0x28] sm:$0xff] %v734
      %791 = vst [vmem:[%s172 + $0x30] sm:$0xff] %v735
      %792 = vst [vmem:[%s172 + $0x38] sm:$0xff] %v736
      %793 = vst [vmem:[%s172 + $0x40] sm:$0xff] %v737
      %794 = vst [vmem:[%s172 + $0x48] sm:$0xff] %v738
      %795 = vst [vmem:[%s172 + $0x50] sm:$0xff] %v739
      %796 = vst [vmem:[%s172 + $0x58] sm:$0xff] %v740
      %797 = vst [vmem:[%s172 + $0x60] sm:$0xff] %v741
      %798 = vst [vmem:[%s172 + $0x68] sm:$0xff] %v742
      %799 = vst [vmem:[%s172 + $0x70] sm:$0xff] %v743
      %800 = vst [vmem:[%s172 + $0x78] sm:$0xff] %v744
      %801 = vst [vmem:[%s172 + $0x80] sm:$0xff] %v745
      %802 = vst [vmem:[%s172 + $0x88] sm:$0xff] %v746
      %803 = vst [vmem:[%s172 + $0x90] sm:$0xff] %v747
      %804 = vst [vmem:[%s172 + $0x98] sm:$0xff] %v748
      %805 = vst [vmem:[%s172 + $0xa0] sm:$0xff] %v749
      %806 = vst [vmem:[%s172 + $0xa8] sm:$0xff] %v750
      %807 = vst [vmem:[%s172 + $0xb0] sm:$0xff] %v751
      %808 = vst [vmem:[%s172 + $0xb8] sm:$0xff] %v752
      %809 = vst [vmem:[%s172 + $0xc0] sm:$0xff] %v753
      %810 = vst [vmem:[%s172 + $0xc8] sm:$0xff] %v754
      %811 = vst [vmem:[%s172 + $0xd0] sm:$0xff] %v755
      %812 = vst [vmem:[%s172 + $0xd8] sm:$0xff] %v756
      %813 = vst [vmem:[%s172 + $0xe0] sm:$0xff] %v757
      %814 = vst [vmem:[%s172 + $0xe8] sm:$0xff] %v758
      %815 = vst [vmem:[%s172 + $0xf0] sm:$0xff] %v759
      %816 = vst [vmem:[%s172 + $0xf8] sm:$0xff] %v760
      %817 = vst [vmem:[%s172 + $0x100] sm:$0xff] %v761
      %818 = vst [vmem:[%s172 + $0x108] sm:$0xff] %v762
      %819 = vst [vmem:[%s172 + $0x110] sm:$0xff] %v763
      %820 = vst [vmem:[%s172 + $0x118] sm:$0xff] %v764
      %821 = vst [vmem:[%s172 + $0x120] sm:$0xff] %v765
      %822 = vst [vmem:[%s172 + $0x128] sm:$0xff] %v766
      %823 = vst [vmem:[%s172 + $0x130] sm:$0xff] %v767
      %824 = vst [vmem:[%s172 + $0x138] sm:$0xff] %v768
      %825 = vst [vmem:[%s172 + $0x140] sm:$0xff] %v769
      %826 = vst [vmem:[%s172 + $0x148] sm:$0xff] %v770
      %827 = vst [vmem:[%s172 + $0x150] sm:$0xff] %v771
      %828 = vst [vmem:[%s172 + $0x158] sm:$0xff] %v772
      %829 = vst [vmem:[%s172 + $0x160] sm:$0xff] %v773
      %830 = vst [vmem:[%s172 + $0x168] sm:$0xff] %v774
      %831 = vst [vmem:[%s172 + $0x170] sm:$0xff] %v775
      %832 = vst [vmem:[%s172 + $0x178] sm:$0xff] %v776
      %833 = vst [vmem:[%s172 + $0x180] sm:$0xff] %v777
      %834 = vst [vmem:[%s172 + $0x188] sm:$0xff] %v778
      %835 = vst [vmem:[%s172 + $0x190] sm:$0xff] %v779
      %836 = vst [vmem:[%s172 + $0x198] sm:$0xff] %v780
      %837 = vst [vmem:[%s172 + $0x1a0] sm:$0xff] %v781
      %838 = vst [vmem:[%s172 + $0x1a8] sm:$0xff] %v782
      %839 = vst [vmem:[%s172 + $0x1b0] sm:$0xff] %v783
      %840 = vst [vmem:[%s172 + $0x1b8] sm:$0xff] %v784
      %s841 = smul.u32 56, %s14
      %p842 = scmp.lt.s32.totalorder %s841, 279
      %s843 = scalar_select %p842, %s841, 279
      %s844 = smul.addr %s843, 8
      %s845 = scalar_lea.vmem %s3, %s844
      // Predicated region
      $region33: #{forward.5} parent=31 // pred_check
        %p846 = pneg %p100
      $region34: #{forward.5} parent=31 // pred_check_branch
        %848 = sbr.rel (%p846) target = $region36
      $region35: #{forward.5} parent=31 // pred_region
        %s849 = smul.u32 56, %s14
      $region36: #{forward.5} parent=31 // pred_fallthru
        _
    $region32: #{forward.5} parent=5 // pred_fallthru
      _
    %p850 = scmp.le.s32.totalorder 2, %s9
    // Predicated region
    $region37: #{forward.5} parent=5 // pred_check
      %p851 = pneg %p850
    $region38: #{forward.5} parent=5 // pred_check_branch
      %853 = sbr.rel (%p851) target = $region40
    $region39: #{forward.5} parent=5 // pred_region
      %s854 = ssub.s32 %s9, 2
      // Predicated region
      $region41: #{forward.5} parent=39 // pred_check
        %p855 = pneg %p106
      $region42: #{forward.5} parent=39 // pred_check_branch
        %857 = sbr.rel (%p855) target = $region44
      $region43: #{forward.5} parent=39 // pred_region
        %s858 = smul.u32 56, %s15
        %p859 = scmp.lt.s32.totalorder %s858, 279
        %s860 = scalar_select %p859, %s858, 279
        %s861 = smul.addr %s860, 8
        %s862 = scalar_lea.vmem %s3, %s861
      $region44: #{forward.5} parent=39 // pred_fallthru
        _
    $region40: #{forward.5} parent=5 // pred_fallthru
      _
  $region6: #{forward.5} parent=0 // loop_footer
    %s13 = sadd.s32 1, %s9
  $region7: #{forward.5} parent=0 // loop_footer_branch
    %8 = sbr.rel target = $region3
  $region8: #{forward.5} parent=0 // loop_exit
    _

// kernel: forward.6
$region0: #{forward.6}
  #allocation0 [shape = 'u32[]', space=smem, size = 0x4, offset = 0x4, fixed_abs, tag = 'smem constant byte address 0x4 - core index']
  #allocation1 [shape = 'u32[72,128]{1,0:T(1,128)}', space=vmem, size = 0x9000, scoped, tag = 'internal scratch']
  %s0 = inlined_call_operand.vmem [shape: bf16[608,64], index: 0, kind: input, shape index: {}]
  %s1 = inlined_call_operand.vmem [shape: bf16[64,128], index: 1, kind: input, shape index: {}]
  %s2 = inlined_call_operand.vmem [shape: f32[1,128], index: 2, kind: input, shape index: {}]
  %s3 = inlined_call_operand.vmem [shape: f32[608,128], index: 3, kind: output, shape index: {}]
  %s4 = sld [smem:[#allocation0]]
  $region45: #{forward.6} parent=0
    _
  %s6 = ssub.s32 1, %s4
  %s7 = scalar_select 0, %s6, %s4
  loop: start=0, step=1, limit=4
  $region2: #{forward.6} parent=0 // loop_pre_header
    _
  $region3: #{forward.6} parent=0 // loop_header
    %s9 = sphi 0, %s13
    %p10 = scmp.ge.s32.totalorder %s9, 4
    %s19 = sphi 0, %s21
    %s22 = sphi 0, %s19
    %s23 = sphi 0, %s22
    %s39 = sphi 0, %s23
    %s43 = sphi 0, %s43
    %s45 = sphi 0, %s43
    %s46 = sphi 0, %s45
    %s60 = sphi 0, %s46
    %s64 = sphi 0, %s64
    %s66 = sphi 0, %s64
    %s67 = sphi 0, %s66
    %s81 = sphi 0, %s67
    %s87 = sphi 0, %s89
    %s90 = sphi 0, %s87
    %s91 = sphi 0, %s90
    %s107 = sphi 0, %s91
  $region4: #{forward.6} parent=0 // loop_header_branch
    %12 = sbr.rel (%p10) target = $region8
  $region5: #{forward.6} parent=0 // loop_body
    %s14 = ssub.s32 %s9, 1
    %s15 = ssub.s32 %s9, 2
    %s16 = sadd.s32 %s9, 1
    %s17 = ssub.s32 %s9, %s16
    %p18 = scmp.eq.s32.totalorder %s17, 0
    %s20 = sadd.s32 %s19, 1
    %s21 = scalar_select %p18, %s19, %s20
    %p24 = pneg %p18
    %p25 = scmp.eq.s32.totalorder %s9, 1
    %p26 = por %p24, %p25
    %p27 = scmp.ne.s32.totalorder %s19, %s22
    %p28 = scmp.eq.s32.totalorder %s9, 0
    %p29 = por %p27, %p28
    %p30 = scmp.ne.s32.totalorder %s19, %s22
    %p31 = scmp.eq.s32.totalorder %s14, 1
    %p32 = por %p30, %p31
    %p33 = scmp.ne.s32.totalorder %s22, %s23
    %p34 = scmp.eq.s32.totalorder %s14, 0
    %p35 = por %p33, %p34
    %p36 = scmp.ne.s32.totalorder %s22, %s23
    %p37 = scmp.eq.s32.totalorder %s15, 1
    %p38 = por %p36, %p37
    %p40 = scmp.ne.s32.totalorder %s23, %s39
    %p41 = scmp.eq.s32.totalorder %s15, 0
    %p42 = por %p40, %p41
    %s44 = sadd.s32 %s43, 1
    %p47 = scmp.eq.s32.totalorder %s9, 1
    %p48 = scmp.ne.s32.totalorder %s43, %s45
    %p49 = scmp.eq.s32.totalorder %s9, 0
    %p50 = por %p48, %p49
    %p51 = scmp.ne.s32.totalorder %s43, %s45
    %p52 = scmp.eq.s32.totalorder %s14, 1
    %p53 = por %p51, %p52
    %p54 = scmp.ne.s32.totalorder %s45, %s46
    %p55 = scmp.eq.s32.totalorder %s14, 0
    %p56 = por %p54, %p55
    %p57 = scmp.ne.s32.totalorder %s45, %s46
    %p58 = scmp.eq.s32.totalorder %s15, 1
    %p59 = por %p57, %p58
    %p61 = scmp.ne.s32.totalorder %s46, %s60
    %p62 = scmp.eq.s32.totalorder %s15, 0
    %p63 = por %p61, %p62
    %s65 = sadd.s32 %s64, 1
    %p68 = scmp.eq.s32.totalorder %s9, 1
    %p69 = scmp.ne.s32.totalorder %s64, %s66
    %p70 = scmp.eq.s32.totalorder %s9, 0
    %p71 = por %p69, %p70
    %p72 = scmp.ne.s32.totalorder %s64, %s66
    %p73 = scmp.eq.s32.totalorder %s14, 1
    %p74 = por %p72, %p73
    %p75 = scmp.ne.s32.totalorder %s66, %s67
    %p76 = scmp.eq.s32.totalorder %s14, 0
    %p77 = por %p75, %p76
    %p78 = scmp.ne.s32.totalorder %s66, %s67
    %p79 = scmp.eq.s32.totalorder %s15, 1
    %p80 = por %p78, %p79
    %p82 = scmp.ne.s32.totalorder %s67, %s81
    %p83 = scmp.eq.s32.totalorder %s15, 0
    %p84 = por %p82, %p83
    %s85 = ssub.s32 %s9, %s16
    %p86 = scmp.eq.s32.totalorder %s85, 0
    %s88 = sadd.s32 %s87, 1
    %s89 = scalar_select %p86, %s87, %s88
    %p92 = pneg %p86
    %p93 = scmp.eq.s32.totalorder %s9, 1
    %p94 = por %p92, %p93
    %p95 = scmp.ne.s32.totalorder %s87, %s90
    %p96 = scmp.eq.s32.totalorder %s9, 0
    %p97 = por %p95, %p96
    %p98 = scmp.ne.s32.totalorder %s87, %s90
    %p99 = scmp.eq.s32.totalorder %s14, 1
    %p100 = por %p98, %p99
    %p101 = scmp.ne.s32.totalorder %s90, %s91
    %p102 = scmp.eq.s32.totalorder %s14, 0
    %p103 = por %p101, %p102
    %p104 = scmp.ne.s32.totalorder %s90, %s91
    %p105 = scmp.eq.s32.totalorder %s15, 1
    %p106 = por %p104, %p105
    %p108 = scmp.ne.s32.totalorder %s91, %s107
    %p109 = scmp.eq.s32.totalorder %s15, 0
    %p110 = por %p108, %p109
    %p111 = scmp.le.s32.totalorder 1, %s9
    %p112 = scmp.lt.s32.totalorder %s9, 3
    %p113 = pnand %p111, %p112
    %p114 = pneg %p113
    // Predicated region
    $region9: #{forward.6} parent=5 // pred_check
      _
    $region10: #{forward.6} parent=5 // pred_check_branch
      %116 = sbr.rel (%p113) target = $region12
    $region11: #{forward.6} parent=5 // pred_region
      %s117 = ssub.s32 %s9, 1
      // Predicated region
      $region13: #{forward.6} parent=11 // pred_check
        %p118 = pneg %p56
      $region14: #{forward.6} parent=11 // pred_check_branch
        %120 = sbr.rel (%p118) target = $region16
      $region15: #{forward.6} parent=11 // pred_region
        _
      $region16: #{forward.6} parent=11 // pred_fallthru
        _
      // Predicated region
      $region17: #{forward.6} parent=11 // pred_check
        %p121 = pneg %p77
      $region18: #{forward.6} parent=11 // pred_check_branch
        %123 = sbr.rel (%p121) target = $region20
      $region19: #{forward.6} parent=11 // pred_region
        _
      $region20: #{forward.6} parent=11 // pred_fallthru
        _
    $region12: #{forward.6} parent=5 // pred_fallthru
      _
    %p124 = scmp.lt.s32.totalorder %s9, 2
    // Predicated region
    $region21: #{forward.6} parent=5 // pred_check
      %p125 = pneg %p124
    $region22: #{forward.6} parent=5 // pred_check_branch
      %127 = sbr.rel (%p125) target = $region24
    $region23: #{forward.6} parent=5 // pred_region
      // Predicated region
      $region25: #{forward.6} parent=23 // pred_check
        %p128 = pneg %p29
      $region26: #{forward.6} parent=23 // pred_check_branch
        %130 = sbr.rel (%p128) target = $region28
      $region27: #{forward.6} parent=23 // pred_region
        %s131 = smul.u32 38, %s9
        %p132 = scmp.lt.s32.totalorder %s131, 75
        %s133 = scalar_select %p132, %s131, 75
        %s134 = smul.addr %s133, 4
        %s135 = scalar_lea.vmem %s0, %s134
        %s136 = smul.u32 38, %s9
      $region28: #{forward.6} parent=23 // pred_fallthru
        _
    $region24: #{forward.6} parent=5 // pred_fallthru
      _
    %p137 = scmp.le.s32.totalorder 1, %s9
    %p138 = scmp.lt.s32.totalorder %s9, 3
    %p139 = pnand %p137, %p138
    %p140 = pneg %p139
    // Predicated region
    $region29: #{forward.6} parent=5 // pred_check
      _
    $region30: #{forward.6} parent=5 // pred_check_branch
      %142 = sbr.rel (%p139) target = $region32
    $region31: #{forward.6} parent=5 // pred_region
      %s143 = ssub.s32 %s9, 1
      %s144 = smul.u32 38, %s14
      %p145 = scmp.lt.s32.totalorder %s144, 75
      %s146 = scalar_select %p145, %s144, 75
      %s147 = smul.addr %s146, 4
      %s148 = scalar_lea.vmem %s0, %s147
      %p149 = pneg %p35
      %p150 = pneg %p32
      %p151 = pneg %p56
      %p152 = pneg %p53
      %p153 = pneg %p77
      %p154 = pneg %p74
      %p155 = pneg %p103
      %p156 = pneg %p100
      %s157 = smul.u32 38, %s14
      %p158 = scmp.lt.s32.totalorder %s157, 75
      %s159 = scalar_select %p158, %s157, 75
      %s160 = smul.addr %s159, 8
      %s161 = scalar_lea.vmem %s3, %s160
      %s162 = smul.u32 38, %s14
      %p163 = scmp.lt.s32.totalorder %s162, 75
      %s164 = scalar_select %p163, %s162, 75
      %s165 = smul.addr %s164, 4
      %s166 = scalar_lea.vmem %s0, %s165
      %s167 = smul.u32 38, %s14
      %s168 = smul.u32 38, %s14
      %p169 = scmp.lt.s32.totalorder %s168, 75
      %s170 = scalar_select %p169, %s168, 75
      %s171 = smul.addr %s170, 8
      %s172 = scalar_lea.vmem %s3, %s171
      %s173 = smul.u32 38, %s14
      %v175 = vld [vmem:[%s166] sm:$0xf]
      %v176 = vld [vmem:[%s166 + $0x4] sm:$0xf]
      %v177 = vld [vmem:[%s166 + $0x8] sm:$0xf]
      %v178 = vld [vmem:[%s166 + $0xc] sm:$0xf]
      %v179 = vld [vmem:[%s166 + $0x10] sm:$0xf]
      %v180 = vld [vmem:[%s166 + $0x14] sm:$0xf]
      %v181 = vld [vmem:[%s166 + $0x18] sm:$0xf]
      %v182 = vld [vmem:[%s166 + $0x1c] sm:$0xf]
      %v183 = vld [vmem:[%s166 + $0x20] sm:$0xf]
      %v184 = vld [vmem:[%s166 + $0x24] sm:$0xf]
      %v185 = vld [vmem:[%s166 + $0x28] sm:$0xf]
      %v186 = vld [vmem:[%s166 + $0x2c] sm:$0xf]
      %v187 = vld [vmem:[%s166 + $0x30] sm:$0xf]
      %v188 = vld [vmem:[%s166 + $0x34] sm:$0xf]
      %v189 = vld [vmem:[%s166 + $0x38] sm:$0xf]
      %v190 = vld [vmem:[%s166 + $0x3c] sm:$0xf]
      %v191 = vld [vmem:[%s166 + $0x40] sm:$0xf]
      %v192 = vld [vmem:[%s166 + $0x44] sm:$0xf]
      %v193 = vld [vmem:[%s166 + $0x48] sm:$0xf]
      %v194 = vld [vmem:[%s166 + $0x4c] sm:$0xf]
      %v195 = vld [vmem:[%s166 + $0x50] sm:$0xf]
      %v196 = vld [vmem:[%s166 + $0x54] sm:$0xf]
      %v197 = vld [vmem:[%s166 + $0x58] sm:$0xf]
      %v198 = vld [vmem:[%s166 + $0x5c] sm:$0xf]
      %v199 = vld [vmem:[%s166 + $0x60] sm:$0xf]
      %v200 = vld [vmem:[%s166 + $0x64] sm:$0xf]
      %v201 = vld [vmem:[%s166 + $0x68] sm:$0xf]
      %v202 = vld [vmem:[%s166 + $0x6c] sm:$0xf]
      %v203 = vld [vmem:[%s166 + $0x70] sm:$0xf]
      %v204 = vld [vmem:[%s166 + $0x74] sm:$0xf]
      %v205 = vld [vmem:[%s166 + $0x78] sm:$0xf]
      %v206 = vld [vmem:[%s166 + $0x7c] sm:$0xf]
      %v207 = vld [vmem:[%s166 + $0x80] sm:$0xf]
      %v208 = vld [vmem:[%s166 + $0x84] sm:$0xf]
      %v209 = vld [vmem:[%s166 + $0x88] sm:$0xf]
      %v210 = vld [vmem:[%s166 + $0x8c] sm:$0xf]
      %v211 = vld [vmem:[%s166 + $0x90] sm:$0xf]
      %v212 = vld [vmem:[%s166 + $0x94] sm:$0xf]
      %v213 = vld [vmem:[%s1] sm:$0xf]
      %v214 = vld [vmem:[%s1 + $0x4] sm:$0xf]
      %v215 = vld [vmem:[%s1 + $0x8] sm:$0xf]
      %v216 = vld [vmem:[%s1 + $0xc] sm:$0xf]
      %v217 = vld [vmem:[%s1 + $0x10] sm:$0xf]
      %v218 = vld [vmem:[%s1 + $0x14] sm:$0xf]
      %v219 = vld [vmem:[%s1 + $0x18] sm:$0xf]
      %v220 = vld [vmem:[%s1 + $0x1c] sm:$0xf]
      %v221 = vld [vmem:[%s2] sm:$0x1]
      %v223 = vperm.slane %v221, 0
      %v263 = vunpack.c.l.b16 %v175
      %v264 = vunpack.c.l.b16 %v176
      %v265 = vunpack.c.l.b16 %v177
      %v266 = vunpack.c.l.b16 %v178
      %v267 = vunpack.c.l.b16 %v179
      %v268 = vunpack.c.l.b16 %v180
      %v269 = vunpack.c.l.b16 %v181
      %v270 = vunpack.c.l.b16 %v182
      %v271 = vunpack.c.l.b16 %v183
      %v272 = vunpack.c.l.b16 %v184
      %v273 = vunpack.c.l.b16 %v185
      %v274 = vunpack.c.l.b16 %v186
      %v275 = vunpack.c.l.b16 %v187
      %v276 = vunpack.c.l.b16 %v188
      %v277 = vunpack.c.l.b16 %v189
      %v278 = vunpack.c.l.b16 %v190
      %v279 = vunpack.c.l.b16 %v191
      %v280 = vunpack.c.l.b16 %v192
      %v281 = vunpack.c.l.b16 %v193
      %v282 = vunpack.c.l.b16 %v194
      %v283 = vunpack.c.l.b16 %v195
      %v284 = vunpack.c.l.b16 %v196
      %v285 = vunpack.c.l.b16 %v197
      %v286 = vunpack.c.l.b16 %v198
      %v287 = vunpack.c.l.b16 %v199
      %v288 = vunpack.c.l.b16 %v200
      %v289 = vunpack.c.l.b16 %v201
      %v290 = vunpack.c.l.b16 %v202
      %v291 = vunpack.c.l.b16 %v203
      %v292 = vunpack.c.l.b16 %v204
      %v293 = vunpack.c.l.b16 %v205
      %v294 = vunpack.c.l.b16 %v206
      %v295 = vunpack.c.l.b16 %v207
      %v296 = vunpack.c.l.b16 %v208
      %v297 = vunpack.c.l.b16 %v209
      %v298 = vunpack.c.l.b16 %v210
      %v299 = vunpack.c.l.b16 %v211
      %v300 = vunpack.c.l.b16 %v212
      %v301 = vpack.c.b16 %v264, %v263
      %v302 = vpack.c.b16 %v266, %v265
      %v303 = vpack.c.b16 %v268, %v267
      %v304 = vpack.c.b16 %v270, %v269
      %v305 = vpack.c.b16 %v272, %v271
      %v306 = vpack.c.b16 %v274, %v273
      %v307 = vpack.c.b16 %v276, %v275
      %v308 = vpack.c.b16 %v278, %v277
      %v309 = vpack.c.b16 %v280, %v279
      %v310 = vpack.c.b16 %v282, %v281
      %v311 = vpack.c.b16 %v284, %v283
      %v312 = vpack.c.b16 %v286, %v285
      %v313 = vpack.c.b16 %v288, %v287
      %v314 = vpack.c.b16 %v290, %v289
      %v315 = vpack.c.b16 %v292, %v291
      %v316 = vpack.c.b16 %v294, %v293
      %v317 = vpack.c.b16 %v296, %v295
      %v318 = vpack.c.b16 %v298, %v297
      %v319 = vpack.c.b16 %v300, %v299
      %v328 = vunpack.c.l.b16 %v213
      %v329 = vunpack.c.l.b16 %v214
      %v330 = vunpack.c.l.b16 %v215
      %v331 = vunpack.c.l.b16 %v216
      %v332 = vunpack.c.l.b16 %v217
      %v333 = vunpack.c.l.b16 %v218
      %v334 = vunpack.c.l.b16 %v219
      %v335 = vunpack.c.l.b16 %v220
      %v336 = vpack.c.b16 %v329, %v328
      %v337 = vpack.c.b16 %v331, %v330
      %v338 = vpack.c.b16 %v333, %v332
      %v339 = vpack.c.b16 %v335, %v334
      %vm344 = vcmask 523264
      %v346 = vsel %vm344, %v301, 0
      %v349 = vsel %vm344, %v302, 0
      %v352 = vsel %vm344, %v303, 0
      %v355 = vsel %vm344, %v304, 0
      %v358 = vsel %vm344, %v305, 0
      %v361 = vsel %vm344, %v306, 0
      %v364 = vsel %vm344, %v307, 0
      %v367 = vsel %vm344, %v308, 0
      %v370 = vsel %vm344, %v309, 0
      %v373 = vsel %vm344, %v310, 0
      %v376 = vsel %vm344, %v311, 0
      %v379 = vsel %vm344, %v312, 0
      %v382 = vsel %vm344, %v313, 0
      %v385 = vsel %vm344, %v314, 0
      %v388 = vsel %vm344, %v315, 0
      %v391 = vsel %vm344, %v316, 0
      %v394 = vsel %vm344, %v317, 0
      %v397 = vsel %vm344, %v318, 0
      %v400 = vsel %vm344, %v319, 0
      %402 = vmatpush.bf16.msra.mxu0 0
      %403 = vmatpush.bf16.msra.mxu0 0
      %404 = vmatpush.bf16.msra.mxu0 0
      %405 = vmatpush.bf16.msra.mxu0 0
      %406 = vmatpush.bf16.msra.mxu0 %v339
      %407 = vmatpush.bf16.msra.mxu0 %v338
      %408 = vmatpush.bf16.msra.mxu0 %v337
      %409 = vmatpush.bf16.msra.mxu0 %v336
      %410 = vmatmul.bf16.gmra.mxu0 %v346
      %v411 = vpop.f32.mrf.mxu0
      %v412 = vadd.f32 %v223, %v411
      %v413 = vpop.f32.mrf.mxu0
      %v414 = vadd.f32 %v223, %v413
      %415 = vmatmul.bf16.gmra.mxu0 %v349
      %v416 = vpop.f32.mrf.mxu0
      %v417 = vadd.f32 %v223, %v416
      %v418 = vpop.f32.mrf.mxu0
      %v419 = vadd.f32 %v223, %v418
      %420 = vmatmul.bf16.gmra.mxu0 %v352
      %v421 = vpop.f32.mrf.mxu0
      %v422 = vadd.f32 %v223, %v421
      %v423 = vpop.f32.mrf.mxu0
      %v424 = vadd.f32 %v223, %v423
      %425 = vmatmul.bf16.gmra.mxu0 %v355
      %v426 = vpop.f32.mrf.mxu0
      %v427 = vadd.f32 %v223, %v426
      %v428 = vpop.f32.mrf.mxu0
      %v429 = vadd.f32 %v223, %v428
      %430 = vmatmul.bf16.gmra.mxu0 %v358
      %v431 = vpop.f32.mrf.mxu0
      %v432 = vadd.f32 %v223, %v431
      %v433 = vpop.f32.mrf.mxu0
      %v434 = vadd.f32 %v223, %v433
      %435 = vmatmul.bf16.gmra.mxu0 %v361
      %v436 = vpop.f32.mrf.mxu0
      %v437 = vadd.f32 %v223, %v436
      %v438 = vpop.f32.mrf.mxu0
      %v439 = vadd.f32 %v223, %v438
      %440 = vmatmul.bf16.gmra.mxu0 %v364
      %v441 = vpop.f32.mrf.mxu0
      %v442 = vadd.f32 %v223, %v441
      %v443 = vpop.f32.mrf.mxu0
      %v444 = vadd.f32 %v223, %v443
      %445 = vmatmul.bf16.gmra.mxu0 %v367
      %v446 = vpop.f32.mrf.mxu0
      %v447 = vadd.f32 %v223, %v446
      %v448 = vpop.f32.mrf.mxu0
      %v449 = vadd.f32 %v223, %v448
      %450 = vmatmul.bf16.gmra.mxu0 %v370
      %v451 = vpop.f32.mrf.mxu0
      %v452 = vadd.f32 %v223, %v451
      %v453 = vpop.f32.mrf.mxu0
      %v454 = vadd.f32 %v223, %v453
      %455 = vmatmul.bf16.gmra.mxu0 %v373
      %v456 = vpop.f32.mrf.mxu0
      %v457 = vadd.f32 %v223, %v456
      %v458 = vpop.f32.mrf.mxu0
      %v459 = vadd.f32 %v223, %v458
      %460 = vmatmul.bf16.gmra.mxu0 %v376
      %v461 = vpop.f32.mrf.mxu0
      %v462 = vadd.f32 %v223, %v461
      %v463 = vpop.f32.mrf.mxu0
      %v464 = vadd.f32 %v223, %v463
      %465 = vmatmul.bf16.gmra.mxu0 %v379
      %v466 = vpop.f32.mrf.mxu0
      %v467 = vadd.f32 %v223, %v466
      %v468 = vpop.f32.mrf.mxu0
      %v469 = vadd.f32 %v223, %v468
      %470 = vmatmul.bf16.gmra.mxu0 %v382
      %v471 = vpop.f32.mrf.mxu0
      %v472 = vadd.f32 %v223, %v471
      %v473 = vpop.f32.mrf.mxu0
      %v474 = vadd.f32 %v223, %v473
      %475 = vmatmul.bf16.gmra.mxu0 %v385
      %v476 = vpop.f32.mrf.mxu0
      %v477 = vadd.f32 %v223, %v476
      %v478 = vpop.f32.mrf.mxu0
      %v479 = vadd.f32 %v223, %v478
      %480 = vmatmul.bf16.gmra.mxu0 %v388
      %v481 = vpop.f32.mrf.mxu0
      %v482 = vadd.f32 %v223, %v481
      %v483 = vpop.f32.mrf.mxu0
      %v484 = vadd.f32 %v223, %v483
      %485 = vmatmul.bf16.gmra.mxu0 %v391
      %v486 = vpop.f32.mrf.mxu0
      %v487 = vadd.f32 %v223, %v486
      %v488 = vpop.f32.mrf.mxu0
      %v489 = vadd.f32 %v223, %v488
      %490 = vmatmul.bf16.gmra.mxu0 %v394
      %v491 = vpop.f32.mrf.mxu0
      %v492 = vadd.f32 %v223, %v491
      %v493 = vpop.f32.mrf.mxu0
      %v494 = vadd.f32 %v223, %v493
      %495 = vmatmul.bf16.gmra.mxu0 %v397
      %v496 = vpop.f32.mrf.mxu0
      %v497 = vadd.f32 %v223, %v496
      %v498 = vpop.f32.mrf.mxu0
      %v499 = vadd.f32 %v223, %v498
      %500 = vmatmul.bf16.gmra.mxu0 %v400
      %v501 = vpop.f32.mrf.mxu0
      %v502 = vadd.f32 %v223, %v501
      %v503 = vpop.f32.mrf.mxu0
      %v504 = vadd.f32 %v223, %v503
      %505 = vdwg.mxu0
      %vm506 = vcmp.ge.f32.partialorder %v412, 0.0
      %vm507 = vcmp.ge.f32.partialorder %v414, 0.0
      %vm508 = vcmp.ge.f32.partialorder %v417, 0.0
      %vm509 = vcmp.ge.f32.partialorder %v419, 0.0
      %vm510 = vcmp.ge.f32.partialorder %v422, 0.0
      %vm511 = vcmp.ge.f32.partialorder %v424, 0.0
      %vm512 = vcmp.ge.f32.partialorder %v427, 0.0
      %vm513 = vcmp.ge.f32.partialorder %v429, 0.0
      %vm514 = vcmp.ge.f32.partialorder %v432, 0.0
      %vm515 = vcmp.ge.f32.partialorder %v434, 0.0
      %vm516 = vcmp.ge.f32.partialorder %v437, 0.0
      %vm517 = vcmp.ge.f32.partialorder %v439, 0.0
      %vm518 = vcmp.ge.f32.partialorder %v442, 0.0
      %vm519 = vcmp.ge.f32.partialorder %v444, 0.0
      %vm520 = vcmp.ge.f32.partialorder %v447, 0.0
      %vm521 = vcmp.ge.f32.partialorder %v449, 0.0
      %vm522 = vcmp.ge.f32.partialorder %v452, 0.0
      %vm523 = vcmp.ge.f32.partialorder %v454, 0.0
      %vm524 = vcmp.ge.f32.partialorder %v457, 0.0
      %vm525 = vcmp.ge.f32.partialorder %v459, 0.0
      %vm526 = vcmp.ge.f32.partialorder %v462, 0.0
      %vm527 = vcmp.ge.f32.partialorder %v464, 0.0
      %vm528 = vcmp.ge.f32.partialorder %v467, 0.0
      %vm529 = vcmp.ge.f32.partialorder %v469, 0.0
      %vm530 = vcmp.ge.f32.partialorder %v472, 0.0
      %vm531 = vcmp.ge.f32.partialorder %v474, 0.0
      %vm532 = vcmp.ge.f32.partialorder %v477, 0.0
      %vm533 = vcmp.ge.f32.partialorder %v479, 0.0
      %vm534 = vcmp.ge.f32.partialorder %v482, 0.0
      %vm535 = vcmp.ge.f32.partialorder %v484, 0.0
      %vm536 = vcmp.ge.f32.partialorder %v487, 0.0
      %vm537 = vcmp.ge.f32.partialorder %v489, 0.0
      %vm538 = vcmp.ge.f32.partialorder %v492, 0.0
      %vm539 = vcmp.ge.f32.partialorder %v494, 0.0
      %vm540 = vcmp.ge.f32.partialorder %v497, 0.0
      %vm541 = vcmp.ge.f32.partialorder %v499, 0.0
      %vm542 = vcmp.ge.f32.partialorder %v502, 0.0
      %vm543 = vcmp.ge.f32.partialorder %v504, 0.0
      %v544 = vmul.f32 %v412, 0.01
      %v545 = vmul.f32 %v414, 0.01
      %v546 = vmul.f32 %v417, 0.01
      %v547 = vmul.f32 %v419, 0.01
      %v548 = vmul.f32 %v422, 0.01
      %v549 = vmul.f32 %v424, 0.01
      %v550 = vmul.f32 %v427, 0.01
      %v551 = vmul.f32 %v429, 0.01
      %v552 = vmul.f32 %v432, 0.01
      %v553 = vmul.f32 %v434, 0.01
      %v554 = vmul.f32 %v437, 0.01
      %v555 = vmul.f32 %v439, 0.01
      %v556 = vmul.f32 %v442, 0.01
      %v557 = vmul.f32 %v444, 0.01
      %v558 = vmul.f32 %v447, 0.01
      %v559 = vmul.f32 %v449, 0.01
      %v560 = vmul.f32 %v452, 0.01
      %v561 = vmul.f32 %v454, 0.01
      %v562 = vmul.f32 %v457, 0.01
      %v563 = vmul.f32 %v459, 0.01
      %v564 = vmul.f32 %v462, 0.01
      %v565 = vmul.f32 %v464, 0.01
      %v566 = vmul.f32 %v467, 0.01
      %v567 = vmul.f32 %v469, 0.01
      %v568 = vmul.f32 %v472, 0.01
      %v569 = vmul.f32 %v474, 0.01
      %v570 = vmul.f32 %v477, 0.01
      %v571 = vmul.f32 %v479, 0.01
      %v572 = vmul.f32 %v482, 0.01
      %v573 = vmul.f32 %v484, 0.01
      %v574 = vmul.f32 %v487, 0.01
      %v575 = vmul.f32 %v489, 0.01
      %v576 = vmul.f32 %v492, 0.01
      %v577 = vmul.f32 %v494, 0.01
      %v578 = vmul.f32 %v497, 0.01
      %v579 = vmul.f32 %v499, 0.01
      %v580 = vmul.f32 %v502, 0.01
      %v581 = vmul.f32 %v504, 0.01
      %v582 = vsel %vm506, %v412, %v544
      %v583 = vsel %vm507, %v414, %v545
      %v584 = vsel %vm508, %v417, %v546
      %v585 = vsel %vm509, %v419, %v547
      %v586 = vsel %vm510, %v422, %v548
      %v587 = vsel %vm511, %v424, %v549
      %v588 = vsel %vm512, %v427, %v550
      %v589 = vsel %vm513, %v429, %v551
      %v590 = vsel %vm514, %v432, %v552
      %v591 = vsel %vm515, %v434, %v553
      %v592 = vsel %vm516, %v437, %v554
      %v593 = vsel %vm517, %v439, %v555
      %v594 = vsel %vm518, %v442, %v556
      %v595 = vsel %vm519, %v444, %v557
      %v596 = vsel %vm520, %v447, %v558
      %v597 = vsel %vm521, %v449, %v559
      %v598 = vsel %vm522, %v452, %v560
      %v599 = vsel %vm523, %v454, %v561
      %v600 = vsel %vm524, %v457, %v562
      %v601 = vsel %vm525, %v459, %v563
      %v602 = vsel %vm526, %v462, %v564
      %v603 = vsel %vm527, %v464, %v565
      %v604 = vsel %vm528, %v467, %v566
      %v605 = vsel %vm529, %v469, %v567
      %v606 = vsel %vm530, %v472, %v568
      %v607 = vsel %vm531, %v474, %v569
      %v608 = vsel %vm532, %v477, %v570
      %v609 = vsel %vm533, %v479, %v571
      %v610 = vsel %vm534, %v482, %v572
      %v611 = vsel %vm535, %v484, %v573
      %v612 = vsel %vm536, %v487, %v574
      %v613 = vsel %vm537, %v489, %v575
      %v614 = vsel %vm538, %v492, %v576
      %v615 = vsel %vm539, %v494, %v577
      %v616 = vsel %vm540, %v497, %v578
      %v617 = vsel %vm541, %v499, %v579
      %v618 = vsel %vm542, %v502, %v580
      %v619 = vsel %vm543, %v504, %v581
      %620 = vst [vmem:[%s172] sm:$0xff] %v582
      %621 = vst [vmem:[%s172 + $0x8] sm:$0xff] %v583
      %622 = vst [vmem:[%s172 + $0x10] sm:$0xff] %v584
      %623 = vst [vmem:[%s172 + $0x18] sm:$0xff] %v585
      %624 = vst [vmem:[%s172 + $0x20] sm:$0xff] %v586
      %625 = vst [vmem:[%s172 + $0x28] sm:$0xff] %v587
      %626 = vst [vmem:[%s172 + $0x30] sm:$0xff] %v588
      %627 = vst [vmem:[%s172 + $0x38] sm:$0xff] %v589
      %628 = vst [vmem:[%s172 + $0x40] sm:$0xff] %v590
      %629 = vst [vmem:[%s172 + $0x48] sm:$0xff] %v591
      %630 = vst [vmem:[%s172 + $0x50] sm:$0xff] %v592
      %631 = vst [vmem:[%s172 + $0x58] sm:$0xff] %v593
      %632 = vst [vmem:[%s172 + $0x60] sm:$0xff] %v594
      %633 = vst [vmem:[%s172 + $0x68] sm:$0xff] %v595
      %634 = vst [vmem:[%s172 + $0x70] sm:$0xff] %v596
      %635 = vst [vmem:[%s172 + $0x78] sm:$0xff] %v597
      %636 = vst [vmem:[%s172 + $0x80] sm:$0xff] %v598
      %637 = vst [vmem:[%s172 + $0x88] sm:$0xff] %v599
      %638 = vst [vmem:[%s172 + $0x90] sm:$0xff] %v600
      %639 = vst [vmem:[%s172 + $0x98] sm:$0xff] %v601
      %640 = vst [vmem:[%s172 + $0xa0] sm:$0xff] %v602
      %641 = vst [vmem:[%s172 + $0xa8] sm:$0xff] %v603
      %642 = vst [vmem:[%s172 + $0xb0] sm:$0xff] %v604
      %643 = vst [vmem:[%s172 + $0xb8] sm:$0xff] %v605
      %644 = vst [vmem:[%s172 + $0xc0] sm:$0xff] %v606
      %645 = vst [vmem:[%s172 + $0xc8] sm:$0xff] %v607
      %646 = vst [vmem:[%s172 + $0xd0] sm:$0xff] %v608
      %647 = vst [vmem:[%s172 + $0xd8] sm:$0xff] %v609
      %648 = vst [vmem:[%s172 + $0xe0] sm:$0xff] %v610
      %649 = vst [vmem:[%s172 + $0xe8] sm:$0xff] %v611
      %650 = vst [vmem:[%s172 + $0xf0] sm:$0xff] %v612
      %651 = vst [vmem:[%s172 + $0xf8] sm:$0xff] %v613
      %652 = vst [vmem:[%s172 + $0x100] sm:$0xff] %v614
      %653 = vst [vmem:[%s172 + $0x108] sm:$0xff] %v615
      %654 = vst [vmem:[%s172 + $0x110] sm:$0xff] %v616
      %655 = vst [vmem:[%s172 + $0x118] sm:$0xff] %v617
      %656 = vst [vmem:[%s172 + $0x120] sm:$0xff] %v618
      %657 = vst [vmem:[%s172 + $0x128] sm:$0xff] %v619
      %s658 = smul.u32 38, %s14
      %p659 = scmp.lt.s32.totalorder %s658, 75
      %s660 = scalar_select %p659, %s658, 75
      %s661 = smul.addr %s660, 8
      %s662 = scalar_lea.vmem %s3, %s661
      // Predicated region
      $region33: #{forward.6} parent=31 // pred_check
        %p663 = pneg %p100
      $region34: #{forward.6} parent=31 // pred_check_branch
        %665 = sbr.rel (%p663) target = $region36
      $region35: #{forward.6} parent=31 // pred_region
        %s666 = smul.u32 38, %s14
      $region36: #{forward.6} parent=31 // pred_fallthru
        _
    $region32: #{forward.6} parent=5 // pred_fallthru
      _
    %p667 = scmp.le.s32.totalorder 2, %s9
    // Predicated region
    $region37: #{forward.6} parent=5 // pred_check
      %p668 = pneg %p667
    $region38: #{forward.6} parent=5 // pred_check_branch
      %670 = sbr.rel (%p668) target = $region40
    $region39: #{forward.6} parent=5 // pred_region
      %s671 = ssub.s32 %s9, 2
      // Predicated region
      $region41: #{forward.6} parent=39 // pred_check
        %p672 = pneg %p106
      $region42: #{forward.6} parent=39 // pred_check_branch
        %674 = sbr.rel (%p672) target = $region44
      $region43: #{forward.6} parent=39 // pred_region
        %s675 = smul.u32 38, %s15
        %p676 = scmp.lt.s32.totalorder %s675, 75
        %s677 = scalar_select %p676, %s675, 75
        %s678 = smul.addr %s677, 8
        %s679 = scalar_lea.vmem %s3, %s678
      $region44: #{forward.6} parent=39 // pred_fallthru
        _
    $region40: #{forward.6} parent=5 // pred_fallthru
      _
  $region6: #{forward.6} parent=0 // loop_footer
    %s13 = sadd.s32 1, %s9
  $region7: #{forward.6} parent=0 // loop_footer_branch
    %8 = sbr.rel target = $region3
  $region8: #{forward.6} parent=0 // loop_exit
    _

// kernel: forward.7
$region0: #{forward.7}
  #allocation0 [shape = 'u32[]', space=smem, size = 0x4, offset = 0x4, fixed_abs, tag = 'smem constant byte address 0x4 - core index']
  #allocation1 [shape = 'u32[72,128]{1,0:T(1,128)}', space=vmem, size = 0x9000, scoped, tag = 'internal scratch']
  %s0 = inlined_call_operand.vmem [shape: bf16[176,128], index: 0, kind: input, shape index: {}]
  %s1 = inlined_call_operand.vmem [shape: bf16[128,128], index: 1, kind: input, shape index: {}]
  %s2 = inlined_call_operand.vmem [shape: f32[1,128], index: 2, kind: input, shape index: {}]
  %s3 = inlined_call_operand.vmem [shape: f32[176,128], index: 3, kind: output, shape index: {}]
  %s4 = sld [smem:[#allocation0]]
  $region22: #{forward.7} parent=0
    _
  %s6 = ssub.s32 1, %s4
  %s7 = scalar_select 0, %s6, %s4
  // Predicated region
  $region2: #{forward.7} parent=0 // pred_check
    _
  $region3: #{forward.7} parent=0 // pred_check_branch
    %9 = sbr.rel (0) target = $region5
  $region4: #{forward.7} parent=0 // pred_region
    _
  $region5: #{forward.7} parent=0 // pred_fallthru
    _
  // Predicated region
  $region6: #{forward.7} parent=0 // pred_check
    _
  $region7: #{forward.7} parent=0 // pred_check_branch
    %11 = sbr.rel (0) target = $region9
  $region8: #{forward.7} parent=0 // pred_region
    _
  $region9: #{forward.7} parent=0 // pred_fallthru
    _
  // Predicated region
  $region10: #{forward.7} parent=0 // pred_check
    _
  $region11: #{forward.7} parent=0 // pred_check_branch
    %13 = sbr.rel (0) target = $region13
  $region12: #{forward.7} parent=0 // pred_region
    _
  $region13: #{forward.7} parent=0 // pred_fallthru
    _
  %v14 = vld [vmem:[%s0] sm:$0xf]
  %v15 = vld [vmem:[%s0 + $0x4] sm:$0xf]
  %v16 = vld [vmem:[%s0 + $0x8] sm:$0xf]
  %v17 = vld [vmem:[%s0 + $0xc] sm:$0xf]
  %v18 = vld [vmem:[%s0 + $0x10] sm:$0xf]
  %v19 = vld [vmem:[%s0 + $0x14] sm:$0xf]
  %v20 = vld [vmem:[%s0 + $0x18] sm:$0xf]
  %v21 = vld [vmem:[%s0 + $0x1c] sm:$0xf]
  %v22 = vld [vmem:[%s0 + $0x20] sm:$0xf]
  %v23 = vld [vmem:[%s0 + $0x24] sm:$0xf]
  %v24 = vld [vmem:[%s0 + $0x28] sm:$0xf]
  %v25 = vld [vmem:[%s0 + $0x2c] sm:$0xf]
  %v26 = vld [vmem:[%s0 + $0x30] sm:$0xf]
  %v27 = vld [vmem:[%s0 + $0x34] sm:$0xf]
  %v28 = vld [vmem:[%s0 + $0x38] sm:$0xf]
  %v29 = vld [vmem:[%s0 + $0x3c] sm:$0xf]
  %v30 = vld [vmem:[%s0 + $0x40] sm:$0xf]
  %v31 = vld [vmem:[%s0 + $0x44] sm:$0xf]
  %v32 = vld [vmem:[%s0 + $0x48] sm:$0xf]
  %v33 = vld [vmem:[%s0 + $0x4c] sm:$0xf]
  %v34 = vld [vmem:[%s0 + $0x50] sm:$0xf]
  %v35 = vld [vmem:[%s0 + $0x54] sm:$0xf]
  %v36 = vld [vmem:[%s1] sm:$0xf]
  %v37 = vld [vmem:[%s1 + $0x4] sm:$0xf]
  %v38 = vld [vmem:[%s1 + $0x8] sm:$0xf]
  %v39 = vld [vmem:[%s1 + $0xc] sm:$0xf]
  %v40 = vld [vmem:[%s1 + $0x10] sm:$0xf]
  %v41 = vld [vmem:[%s1 + $0x14] sm:$0xf]
  %v42 = vld [vmem:[%s1 + $0x18] sm:$0xf]
  %v43 = vld [vmem:[%s1 + $0x1c] sm:$0xf]
  %v44 = vld [vmem:[%s1 + $0x20] sm:$0xf]
  %v45 = vld [vmem:[%s1 + $0x24] sm:$0xf]
  %v46 = vld [vmem:[%s1 + $0x28] sm:$0xf]
  %v47 = vld [vmem:[%s1 + $0x2c] sm:$0xf]
  %v48 = vld [vmem:[%s1 + $0x30] sm:$0xf]
  %v49 = vld [vmem:[%s1 + $0x34] sm:$0xf]
  %v50 = vld [vmem:[%s1 + $0x38] sm:$0xf]
  %v51 = vld [vmem:[%s1 + $0x3c] sm:$0xf]
  %v52 = vld [vmem:[%s2] sm:$0x1]
  %v54 = vperm.slane %v52, 0
  %v78 = vunpack.c.l.b16 %v14
  %v79 = vunpack.c.l.b16 %v15
  %v80 = vunpack.c.l.b16 %v16
  %v81 = vunpack.c.l.b16 %v17
  %v82 = vunpack.c.l.b16 %v18
  %v83 = vunpack.c.l.b16 %v19
  %v84 = vunpack.c.l.b16 %v20
  %v85 = vunpack.c.l.b16 %v21
  %v86 = vunpack.c.l.b16 %v22
  %v87 = vunpack.c.l.b16 %v23
  %v88 = vunpack.c.l.b16 %v24
  %v89 = vunpack.c.l.b16 %v25
  %v90 = vunpack.c.l.b16 %v26
  %v91 = vunpack.c.l.b16 %v27
  %v92 = vunpack.c.l.b16 %v28
  %v93 = vunpack.c.l.b16 %v29
  %v94 = vunpack.c.l.b16 %v30
  %v95 = vunpack.c.l.b16 %v31
  %v96 = vunpack.c.l.b16 %v32
  %v97 = vunpack.c.l.b16 %v33
  %v98 = vunpack.c.l.b16 %v34
  %v99 = vunpack.c.l.b16 %v35
  %v100 = vpack.c.b16 %v79, %v78
  %v101 = vpack.c.b16 %v81, %v80
  %v102 = vpack.c.b16 %v83, %v82
  %v103 = vpack.c.b16 %v85, %v84
  %v104 = vpack.c.b16 %v87, %v86
  %v105 = vpack.c.b16 %v89, %v88
  %v106 = vpack.c.b16 %v91, %v90
  %v107 = vpack.c.b16 %v93, %v92
  %v108 = vpack.c.b16 %v95, %v94
  %v109 = vpack.c.b16 %v97, %v96
  %v110 = vpack.c.b16 %v99, %v98
  %v138 = vunpack.c.l.b16 %v36
  %v139 = vunpack.c.l.b16 %v37
  %v140 = vunpack.c.l.b16 %v38
  %v141 = vunpack.c.l.b16 %v39
  %v142 = vunpack.c.l.b16 %v40
  %v143 = vunpack.c.l.b16 %v41
  %v144 = vunpack.c.l.b16 %v42
  %v145 = vunpack.c.l.b16 %v43
  %v146 = vunpack.c.l.b16 %v44
  %v147 = vunpack.c.l.b16 %v45
  %v148 = vunpack.c.l.b16 %v46
  %v149 = vunpack.c.l.b16 %v47
  %v150 = vunpack.c.l.b16 %v48
  %v151 = vunpack.c.l.b16 %v49
  %v152 = vunpack.c.l.b16 %v50
  %v153 = vunpack.c.l.b16 %v51
  %v154 = vpack.c.b16 %v139, %v138
  %v155 = vpack.c.b16 %v141, %v140
  %v156 = vpack.c.b16 %v143, %v142
  %v157 = vpack.c.b16 %v145, %v144
  %v158 = vpack.c.b16 %v147, %v146
  %v159 = vpack.c.b16 %v149, %v148
  %v160 = vpack.c.b16 %v151, %v150
  %v161 = vpack.c.b16 %v153, %v152
  %170 = vmatpush.bf16.msra.mxu0 %v161
  %171 = vmatpush.bf16.msra.mxu0 %v160
  %172 = vmatpush.bf16.msra.mxu0 %v159
  %173 = vmatpush.bf16.msra.mxu0 %v158
  %174 = vmatpush.bf16.msra.mxu0 %v157
  %175 = vmatpush.bf16.msra.mxu0 %v156
  %176 = vmatpush.bf16.msra.mxu0 %v155
  %177 = vmatpush.bf16.msra.mxu0 %v154
  %178 = vmatmul.bf16.gmra.mxu0 %v100
  %v179 = vpop.f32.mrf.mxu0
  %v180 = vadd.f32 %v54, %v179
  %v181 = vpop.f32.mrf.mxu0
  %v182 = vadd.f32 %v54, %v181
  %183 = vmatmul.bf16.gmra.mxu0 %v101
  %v184 = vpop.f32.mrf.mxu0
  %v185 = vadd.f32 %v54, %v184
  %v186 = vpop.f32.mrf.mxu0
  %v187 = vadd.f32 %v54, %v186
  %188 = vmatmul.bf16.gmra.mxu0 %v102
  %v189 = vpop.f32.mrf.mxu0
  %v190 = vadd.f32 %v54, %v189
  %v191 = vpop.f32.mrf.mxu0
  %v192 = vadd.f32 %v54, %v191
  %193 = vmatmul.bf16.gmra.mxu0 %v103
  %v194 = vpop.f32.mrf.mxu0
  %v195 = vadd.f32 %v54, %v194
  %v196 = vpop.f32.mrf.mxu0
  %v197 = vadd.f32 %v54, %v196
  %198 = vmatmul.bf16.gmra.mxu0 %v104
  %v199 = vpop.f32.mrf.mxu0
  %v200 = vadd.f32 %v54, %v199
  %v201 = vpop.f32.mrf.mxu0
  %v202 = vadd.f32 %v54, %v201
  %203 = vmatmul.bf16.gmra.mxu0 %v105
  %v204 = vpop.f32.mrf.mxu0
  %v205 = vadd.f32 %v54, %v204
  %v206 = vpop.f32.mrf.mxu0
  %v207 = vadd.f32 %v54, %v206
  %208 = vmatmul.bf16.gmra.mxu0 %v106
  %v209 = vpop.f32.mrf.mxu0
  %v210 = vadd.f32 %v54, %v209
  %v211 = vpop.f32.mrf.mxu0
  %v212 = vadd.f32 %v54, %v211
  %213 = vmatmul.bf16.gmra.mxu0 %v107
  %v214 = vpop.f32.mrf.mxu0
  %v215 = vadd.f32 %v54, %v214
  %v216 = vpop.f32.mrf.mxu0
  %v217 = vadd.f32 %v54, %v216
  %218 = vmatmul.bf16.gmra.mxu0 %v108
  %v219 = vpop.f32.mrf.mxu0
  %v220 = vadd.f32 %v54, %v219
  %v221 = vpop.f32.mrf.mxu0
  %v222 = vadd.f32 %v54, %v221
  %223 = vmatmul.bf16.gmra.mxu0 %v109
  %v224 = vpop.f32.mrf.mxu0
  %v225 = vadd.f32 %v54, %v224
  %v226 = vpop.f32.mrf.mxu0
  %v227 = vadd.f32 %v54, %v226
  %228 = vmatmul.bf16.gmra.mxu0 %v110
  %v229 = vpop.f32.mrf.mxu0
  %v230 = vadd.f32 %v54, %v229
  %v231 = vpop.f32.mrf.mxu0
  %v232 = vadd.f32 %v54, %v231
  %233 = vdwg.mxu0
  %vm234 = vcmp.ge.f32.partialorder %v180, 0.0
  %vm235 = vcmp.ge.f32.partialorder %v182, 0.0
  %vm236 = vcmp.ge.f32.partialorder %v185, 0.0
  %vm237 = vcmp.ge.f32.partialorder %v187, 0.0
  %vm238 = vcmp.ge.f32.partialorder %v190, 0.0
  %vm239 = vcmp.ge.f32.partialorder %v192, 0.0
  %vm240 = vcmp.ge.f32.partialorder %v195, 0.0
  %vm241 = vcmp.ge.f32.partialorder %v197, 0.0
  %vm242 = vcmp.ge.f32.partialorder %v200, 0.0
  %vm243 = vcmp.ge.f32.partialorder %v202, 0.0
  %vm244 = vcmp.ge.f32.partialorder %v205, 0.0
  %vm245 = vcmp.ge.f32.partialorder %v207, 0.0
  %vm246 = vcmp.ge.f32.partialorder %v210, 0.0
  %vm247 = vcmp.ge.f32.partialorder %v212, 0.0
  %vm248 = vcmp.ge.f32.partialorder %v215, 0.0
  %vm249 = vcmp.ge.f32.partialorder %v217, 0.0
  %vm250 = vcmp.ge.f32.partialorder %v220, 0.0
  %vm251 = vcmp.ge.f32.partialorder %v222, 0.0
  %vm252 = vcmp.ge.f32.partialorder %v225, 0.0
  %vm253 = vcmp.ge.f32.partialorder %v227, 0.0
  %vm254 = vcmp.ge.f32.partialorder %v230, 0.0
  %vm255 = vcmp.ge.f32.partialorder %v232, 0.0
  %v256 = vmul.f32 %v180, 0.01
  %v257 = vmul.f32 %v182, 0.01
  %v258 = vmul.f32 %v185, 0.01
  %v259 = vmul.f32 %v187, 0.01
  %v260 = vmul.f32 %v190, 0.01
  %v261 = vmul.f32 %v192, 0.01
  %v262 = vmul.f32 %v195, 0.01
  %v263 = vmul.f32 %v197, 0.01
  %v264 = vmul.f32 %v200, 0.01
  %v265 = vmul.f32 %v202, 0.01
  %v266 = vmul.f32 %v205, 0.01
  %v267 = vmul.f32 %v207, 0.01
  %v268 = vmul.f32 %v210, 0.01
  %v269 = vmul.f32 %v212, 0.01
  %v270 = vmul.f32 %v215, 0.01
  %v271 = vmul.f32 %v217, 0.01
  %v272 = vmul.f32 %v220, 0.01
  %v273 = vmul.f32 %v222, 0.01
  %v274 = vmul.f32 %v225, 0.01
  %v275 = vmul.f32 %v227, 0.01
  %v276 = vmul.f32 %v230, 0.01
  %v277 = vmul.f32 %v232, 0.01
  %v278 = vsel %vm234, %v180, %v256
  %v279 = vsel %vm235, %v182, %v257
  %v280 = vsel %vm236, %v185, %v258
  %v281 = vsel %vm237, %v187, %v259
  %v282 = vsel %vm238, %v190, %v260
  %v283 = vsel %vm239, %v192, %v261
  %v284 = vsel %vm240, %v195, %v262
  %v285 = vsel %vm241, %v197, %v263
  %v286 = vsel %vm242, %v200, %v264
  %v287 = vsel %vm243, %v202, %v265
  %v288 = vsel %vm244, %v205, %v266
  %v289 = vsel %vm245, %v207, %v267
  %v290 = vsel %vm246, %v210, %v268
  %v291 = vsel %vm247, %v212, %v269
  %v292 = vsel %vm248, %v215, %v270
  %v293 = vsel %vm249, %v217, %v271
  %v294 = vsel %vm250, %v220, %v272
  %v295 = vsel %vm251, %v222, %v273
  %v296 = vsel %vm252, %v225, %v274
  %v297 = vsel %vm253, %v227, %v275
  %v298 = vsel %vm254, %v230, %v276
  %v299 = vsel %vm255, %v232, %v277
  %300 = vst [vmem:[%s3] sm:$0xff] %v278
  %301 = vst [vmem:[%s3 + $0x8] sm:$0xff] %v279
  %302 = vst [vmem:[%s3 + $0x10] sm:$0xff] %v280
  %303 = vst [vmem:[%s3 + $0x18] sm:$0xff] %v281
  %304 = vst [vmem:[%s3 + $0x20] sm:$0xff] %v282
  %305 = vst [vmem:[%s3 + $0x28] sm:$0xff] %v283
  %306 = vst [vmem:[%s3 + $0x30] sm:$0xff] %v284
  %307 = vst [vmem:[%s3 + $0x38] sm:$0xff] %v285
  %308 = vst [vmem:[%s3 + $0x40] sm:$0xff] %v286
  %309 = vst [vmem:[%s3 + $0x48] sm:$0xff] %v287
  %310 = vst [vmem:[%s3 + $0x50] sm:$0xff] %v288
  %311 = vst [vmem:[%s3 + $0x58] sm:$0xff] %v289
  %312 = vst [vmem:[%s3 + $0x60] sm:$0xff] %v290
  %313 = vst [vmem:[%s3 + $0x68] sm:$0xff] %v291
  %314 = vst [vmem:[%s3 + $0x70] sm:$0xff] %v292
  %315 = vst [vmem:[%s3 + $0x78] sm:$0xff] %v293
  %316 = vst [vmem:[%s3 + $0x80] sm:$0xff] %v294
  %317 = vst [vmem:[%s3 + $0x88] sm:$0xff] %v295
  %318 = vst [vmem:[%s3 + $0x90] sm:$0xff] %v296
  %319 = vst [vmem:[%s3 + $0x98] sm:$0xff] %v297
  %320 = vst [vmem:[%s3 + $0xa0] sm:$0xff] %v298
  %321 = vst [vmem:[%s3 + $0xa8] sm:$0xff] %v299
  // Predicated region
  $region14: #{forward.7} parent=0 // pred_check
    _
  $region15: #{forward.7} parent=0 // pred_check_branch
    %323 = sbr.rel (0) target = $region17
  $region16: #{forward.7} parent=0 // pred_region
    _
  $region17: #{forward.7} parent=0 // pred_fallthru
    _
  // Predicated region
  $region18: #{forward.7} parent=0 // pred_check
    _
  $region19: #{forward.7} parent=0 // pred_check_branch
    %325 = sbr.rel (0) target = $region21
  $region20: #{forward.7} parent=0 // pred_region
    _
  $region21: #{forward.7} parent=0 // pred_fallthru
    _

// kernel: forward.8
$region0: #{forward.8}
  #allocation0 [shape = 'u32[]', space=smem, size = 0x4, offset = 0x4, fixed_abs, tag = 'smem constant byte address 0x4 - core index']
  #allocation1 [shape = 'u32[72,128]{1,0:T(1,128)}', space=vmem, size = 0x9000, scoped, tag = 'internal scratch']
  %s0 = inlined_call_operand.vmem [shape: bf16[64,256], index: 0, kind: input, shape index: {}]
  %s1 = inlined_call_operand.vmem [shape: bf16[256,128], index: 1, kind: input, shape index: {}]
  %s2 = inlined_call_operand.vmem [shape: f32[1,128], index: 2, kind: input, shape index: {}]
  %s3 = inlined_call_operand.vmem [shape: f32[64,128], index: 3, kind: output, shape index: {}]
  %s4 = sld [smem:[#allocation0]]
  $region22: #{forward.8} parent=0
    _
  %s6 = ssub.s32 1, %s4
  %s7 = scalar_select 0, %s6, %s4
  // Predicated region
  $region2: #{forward.8} parent=0 // pred_check
    _
  $region3: #{forward.8} parent=0 // pred_check_branch
    %9 = sbr.rel (0) target = $region5
  $region4: #{forward.8} parent=0 // pred_region
    _
  $region5: #{forward.8} parent=0 // pred_fallthru
    _
  // Predicated region
  $region6: #{forward.8} parent=0 // pred_check
    _
  $region7: #{forward.8} parent=0 // pred_check_branch
    %11 = sbr.rel (0) target = $region9
  $region8: #{forward.8} parent=0 // pred_region
    _
  $region9: #{forward.8} parent=0 // pred_fallthru
    _
  // Predicated region
  $region10: #{forward.8} parent=0 // pred_check
    _
  $region11: #{forward.8} parent=0 // pred_check_branch
    %13 = sbr.rel (0) target = $region13
  $region12: #{forward.8} parent=0 // pred_region
    _
  $region13: #{forward.8} parent=0 // pred_fallthru
    _
  %v14 = vld [vmem:[%s0] sm:$0xff]
  %v15 = vld [vmem:[%s0 + $0x8] sm:$0xff]
  %v16 = vld [vmem:[%s0 + $0x10] sm:$0xff]
  %v17 = vld [vmem:[%s0 + $0x18] sm:$0xff]
  %v18 = vld [vmem:[%s0 + $0x20] sm:$0xff]
  %v19 = vld [vmem:[%s0 + $0x28] sm:$0xff]
  %v20 = vld [vmem:[%s0 + $0x30] sm:$0xff]
  %v21 = vld [vmem:[%s0 + $0x38] sm:$0xff]
  %v22 = vld [vmem:[%s1] sm:$0xf]
  %v23 = vld [vmem:[%s1 + $0x4] sm:$0xf]
  %v24 = vld [vmem:[%s1 + $0x8] sm:$0xf]
  %v25 = vld [vmem:[%s1 + $0xc] sm:$0xf]
  %v26 = vld [vmem:[%s1 + $0x10] sm:$0xf]
  %v27 = vld [vmem:[%s1 + $0x14] sm:$0xf]
  %v28 = vld [vmem:[%s1 + $0x18] sm:$0xf]
  %v29 = vld [vmem:[%s1 + $0x1c] sm:$0xf]
  %v30 = vld [vmem:[%s1 + $0x20] sm:$0xf]
  %v31 = vld [vmem:[%s1 + $0x24] sm:$0xf]
  %v32 = vld [vmem:[%s1 + $0x28] sm:$0xf]
  %v33 = vld [vmem:[%s1 + $0x2c] sm:$0xf]
  %v34 = vld [vmem:[%s1 + $0x30] sm:$0xf]
  %v35 = vld [vmem:[%s1 + $0x34] sm:$0xf]
  %v36 = vld [vmem:[%s1 + $0x38] sm:$0xf]
  %v37 = vld [vmem:[%s1 + $0x3c] sm:$0xf]
  %v38 = vld [vmem:[%s1 + $0x40] sm:$0xf]
  %v39 = vld [vmem:[%s1 + $0x44] sm:$0xf]
  %v40 = vld [vmem:[%s1 + $0x48] sm:$0xf]
  %v41 = vld [vmem:[%s1 + $0x4c] sm:$0xf]
  %v42 = vld [vmem:[%s1 + $0x50] sm:$0xf]
  %v43 = vld [vmem:[%s1 + $0x54] sm:$0xf]
  %v44 = vld [vmem:[%s1 + $0x58] sm:$0xf]
  %v45 = vld [vmem:[%s1 + $0x5c] sm:$0xf]
  %v46 = vld [vmem:[%s1 + $0x60] sm:$0xf]
  %v47 = vld [vmem:[%s1 + $0x64] sm:$0xf]
  %v48 = vld [vmem:[%s1 + $0x68] sm:$0xf]
  %v49 = vld [vmem:[%s1 + $0x6c] sm:$0xf]
  %v50 = vld [vmem:[%s1 + $0x70] sm:$0xf]
  %v51 = vld [vmem:[%s1 + $0x74] sm:$0xf]
  %v52 = vld [vmem:[%s1 + $0x78] sm:$0xf]
  %v53 = vld [vmem:[%s1 + $0x7c] sm:$0xf]
  %v54 = vld [vmem:[%s2] sm:$0x1]
  %v56 = vperm.slane %v54, 0
  %v66 = vunpack.c.l.b16 %v14
  %v67 = vunpack.c.h.b16 %v14
  %v68 = vunpack.c.l.b16 %v15
  %v69 = vunpack.c.h.b16 %v15
  %v70 = vunpack.c.l.b16 %v16
  %v71 = vunpack.c.h.b16 %v16
  %v72 = vunpack.c.l.b16 %v17
  %v73 = vunpack.c.h.b16 %v17
  %v74 = vunpack.c.l.b16 %v18
  %v75 = vunpack.c.h.b16 %v18
  %v76 = vunpack.c.l.b16 %v19
  %v77 = vunpack.c.h.b16 %v19
  %v78 = vunpack.c.l.b16 %v20
  %v79 = vunpack.c.h.b16 %v20
  %v80 = vunpack.c.l.b16 %v21
  %v81 = vunpack.c.h.b16 %v21
  %v82 = vpack.c.b16 %v68, %v66
  %v83 = vpack.c.b16 %v69, %v67
  %v84 = vpack.c.b16 %v72, %v70
  %v85 = vpack.c.b16 %v73, %v71
  %v86 = vpack.c.b16 %v76, %v74
  %v87 = vpack.c.b16 %v77, %v75
  %v88 = vpack.c.b16 %v80, %v78
  %v89 = vpack.c.b16 %v81, %v79
  %v130 = vunpack.c.l.b16 %v22
  %v131 = vunpack.c.l.b16 %v23
  %v132 = vunpack.c.l.b16 %v24
  %v133 = vunpack.c.l.b16 %v25
  %v134 = vunpack.c.l.b16 %v26
  %v135 = vunpack.c.l.b16 %v27
  %v136 = vunpack.c.l.b16 %v28
  %v137 = vunpack.c.l.b16 %v29
  %v138 = vunpack.c.l.b16 %v30
  %v139 = vunpack.c.l.b16 %v31
  %v140 = vunpack.c.l.b16 %v32
  %v141 = vunpack.c.l.b16 %v33
  %v142 = vunpack.c.l.b16 %v34
  %v143 = vunpack.c.l.b16 %v35
  %v144 = vunpack.c.l.b16 %v36
  %v145 = vunpack.c.l.b16 %v37
  %v146 = vunpack.c.l.b16 %v38
  %v147 = vunpack.c.l.b16 %v39
  %v148 = vunpack.c.l.b16 %v40
  %v149 = vunpack.c.l.b16 %v41
  %v150 = vunpack.c.l.b16 %v42
  %v151 = vunpack.c.l.b16 %v43
  %v152 = vunpack.c.l.b16 %v44
  %v153 = vunpack.c.l.b16 %v45
  %v154 = vunpack.c.l.b16 %v46
  %v155 = vunpack.c.l.b16 %v47
  %v156 = vunpack.c.l.b16 %v48
  %v157 = vunpack.c.l.b16 %v49
  %v158 = vunpack.c.l.b16 %v50
  %v159 = vunpack.c.l.b16 %v51
  %v160 = vunpack.c.l.b16 %v52
  %v161 = vunpack.c.l.b16 %v53
  %v162 = vpack.c.b16 %v131, %v130
  %v163 = vpack.c.b16 %v133, %v132
  %v164 = vpack.c.b16 %v135, %v134
  %v165 = vpack.c.b16 %v137, %v136
  %v166 = vpack.c.b16 %v139, %v138
  %v167 = vpack.c.b16 %v141, %v140
  %v168 = vpack.c.b16 %v143, %v142
  %v169 = vpack.c.b16 %v145, %v144
  %v170 = vpack.c.b16 %v147, %v146
  %v171 = vpack.c.b16 %v149, %v148
  %v172 = vpack.c.b16 %v151, %v150
  %v173 = vpack.c.b16 %v153, %v152
  %v174 = vpack.c.b16 %v155, %v154
  %v175 = vpack.c.b16 %v157, %v156
  %v176 = vpack.c.b16 %v159, %v158
  %v177 = vpack.c.b16 %v161, %v160
  %194 = vmatpush.bf16.msra.mxu0 %v169
  %195 = vmatpush.bf16.msra.mxu0 %v168
  %196 = vmatpush.bf16.msra.mxu0 %v167
  %197 = vmatpush.bf16.msra.mxu0 %v166
  %198 = vmatpush.bf16.msra.mxu0 %v165
  %199 = vmatpush.bf16.msra.mxu0 %v164
  %200 = vmatpush.bf16.msra.mxu0 %v163
  %201 = vmatpush.bf16.msra.mxu0 %v162
  %202 = vmatmul.bf16.gmra.mxu0 %v82
  %v203 = vpop.f32.mrf.mxu0
  %v204 = vadd.f32 %v56, %v203
  %v205 = vpop.f32.mrf.mxu0
  %v206 = vadd.f32 %v56, %v205
  %207 = vmatmul.bf16.gmra.mxu0 %v84
  %v208 = vpop.f32.mrf.mxu0
  %v209 = vadd.f32 %v56, %v208
  %v210 = vpop.f32.mrf.mxu0
  %v211 = vadd.f32 %v56, %v210
  %212 = vmatmul.bf16.gmra.mxu0 %v86
  %v213 = vpop.f32.mrf.mxu0
  %v214 = vadd.f32 %v56, %v213
  %v215 = vpop.f32.mrf.mxu0
  %v216 = vadd.f32 %v56, %v215
  %217 = vmatmul.bf16.gmra.mxu0 %v88
  %v218 = vpop.f32.mrf.mxu0
  %v219 = vadd.f32 %v56, %v218
  %v220 = vpop.f32.mrf.mxu0
  %v221 = vadd.f32 %v56, %v220
  %222 = vdwg.mxu0
  %223 = vmatpush.bf16.msra.mxu0 %v177
  %224 = vmatpush.bf16.msra.mxu0 %v176
  %225 = vmatpush.bf16.msra.mxu0 %v175
  %226 = vmatpush.bf16.msra.mxu0 %v174
  %227 = vmatpush.bf16.msra.mxu0 %v173
  %228 = vmatpush.bf16.msra.mxu0 %v172
  %229 = vmatpush.bf16.msra.mxu0 %v171
  %230 = vmatpush.bf16.msra.mxu0 %v170
  %231 = vmatmul.bf16.gmra.mxu0 %v83
  %v232 = vpop.f32.mrf.mxu0
  %v233 = vadd.f32 %v204, %v232
  %v234 = vpop.f32.mrf.mxu0
  %v235 = vadd.f32 %v206, %v234
  %236 = vmatmul.bf16.gmra.mxu0 %v85
  %v237 = vpop.f32.mrf.mxu0
  %v238 = vadd.f32 %v209, %v237
  %v239 = vpop.f32.mrf.mxu0
  %v240 = vadd.f32 %v211, %v239
  %241 = vmatmul.bf16.gmra.mxu0 %v87
  %v242 = vpop.f32.mrf.mxu0
  %v243 = vadd.f32 %v214, %v242
  %v244 = vpop.f32.mrf.mxu0
  %v245 = vadd.f32 %v216, %v244
  %246 = vmatmul.bf16.gmra.mxu0 %v89
  %v247 = vpop.f32.mrf.mxu0
  %v248 = vadd.f32 %v219, %v247
  %v249 = vpop.f32.mrf.mxu0
  %v250 = vadd.f32 %v221, %v249
  %251 = vdwg.mxu0
  %vm252 = vcmp.ge.f32.partialorder %v233, 0.0
  %vm253 = vcmp.ge.f32.partialorder %v235, 0.0
  %vm254 = vcmp.ge.f32.partialorder %v238, 0.0
  %vm255 = vcmp.ge.f32.partialorder %v240, 0.0
  %vm256 = vcmp.ge.f32.partialorder %v243, 0.0
  %vm257 = vcmp.ge.f32.partialorder %v245, 0.0
  %vm258 = vcmp.ge.f32.partialorder %v248, 0.0
  %vm259 = vcmp.ge.f32.partialorder %v250, 0.0
  %v260 = vmul.f32 %v233, 0.01
  %v261 = vmul.f32 %v235, 0.01
  %v262 = vmul.f32 %v238, 0.01
  %v263 = vmul.f32 %v240, 0.01
  %v264 = vmul.f32 %v243, 0.01
  %v265 = vmul.f32 %v245, 0.01
  %v266 = vmul.f32 %v248, 0.01
  %v267 = vmul.f32 %v250, 0.01
  %v268 = vsel %vm252, %v233, %v260
  %v269 = vsel %vm253, %v235, %v261
  %v270 = vsel %vm254, %v238, %v262
  %v271 = vsel %vm255, %v240, %v263
  %v272 = vsel %vm256, %v243, %v264
  %v273 = vsel %vm257, %v245, %v265
  %v274 = vsel %vm258, %v248, %v266
  %v275 = vsel %vm259, %v250, %v267
  %276 = vst [vmem:[%s3] sm:$0xff] %v268
  %277 = vst [vmem:[%s3 + $0x8] sm:$0xff] %v269
  %278 = vst [vmem:[%s3 + $0x10] sm:$0xff] %v270
  %279 = vst [vmem:[%s3 + $0x18] sm:$0xff] %v271
  %280 = vst [vmem:[%s3 + $0x20] sm:$0xff] %v272
  %281 = vst [vmem:[%s3 + $0x28] sm:$0xff] %v273
  %282 = vst [vmem:[%s3 + $0x30] sm:$0xff] %v274
  %283 = vst [vmem:[%s3 + $0x38] sm:$0xff] %v275
  // Predicated region
  $region14: #{forward.8} parent=0 // pred_check
    _
  $region15: #{forward.8} parent=0 // pred_check_branch
    %285 = sbr.rel (0) target = $region17
  $region16: #{forward.8} parent=0 // pred_region
    _
  $region17: #{forward.8} parent=0 // pred_fallthru
    _
  // Predicated region
  $region18: #{forward.8} parent=0 // pred_check
    _
  $region19: #{forward.8} parent=0 // pred_check_branch
    %287 = sbr.rel (0) target = $region21
  $region20: #{forward.8} parent=0 // pred_region
    _
  $region21: #{forward.8} parent=0 // pred_fallthru
    _

// kernel: forward.9
$region0: #{forward.9}
  #allocation0 [shape = 'u32[]', space=smem, size = 0x4, offset = 0x4, fixed_abs, tag = 'smem constant byte address 0x4 - core index']
  #allocation1 [shape = 'u32[72,128]{1,0:T(1,128)}', space=vmem, size = 0x9000, scoped, tag = 'internal scratch']
  %s0 = inlined_call_operand.vmem [shape: bf16[2,512], index: 0, kind: input, shape index: {}]
  %s1 = inlined_call_operand.vmem [shape: bf16[512,32], index: 1, kind: input, shape index: {}]
  %s2 = inlined_call_operand.vmem [shape: f32[1,32], index: 2, kind: input, shape index: {}]
  %s3 = inlined_call_operand.vmem [shape: bf16[32,64], index: 3, kind: input, shape index: {}]
  %s4 = inlined_call_operand.vmem [shape: f32[1,64], index: 4, kind: input, shape index: {}]
  %s5 = inlined_call_operand.vmem [shape: bf16[64,128], index: 5, kind: input, shape index: {}]
  %s6 = inlined_call_operand.vmem [shape: f32[1,128], index: 6, kind: input, shape index: {}]
  %s7 = inlined_call_operand.vmem [shape: bf16[128,256], index: 7, kind: input, shape index: {}]
  %s8 = inlined_call_operand.vmem [shape: f32[1,256], index: 8, kind: input, shape index: {}]
  %s9 = inlined_call_operand.hbm [shape: f32[2,32], index: 9, kind: output, shape index: {0}]
  %s10 = inlined_call_operand.hbm [shape: f32[2,256], index: 10, kind: output, shape index: {1}]
  %11 = xla_tuple %s9, %s10
  %s12 = sld [smem:[#allocation0]]
  $region54: #{forward.9} parent=0
    _
  %s14 = ssub.s32 1, %s12
  %s15 = scalar_select 0, %s14, %s12
  $region1: #{forward.9} parent=0
    #allocation2 [shape = 'u8[1024]{0}', space=vmem, size = 0x400, scoped, tag = 'output window, operand 0, single buffered']
    #allocation3 [shape = 's32[1]{0}', space=sflag, size = 0x4, scoped, tag = 'scoped memory for forward.9']
    #allocation4 [shape = 'u8[2048]{0}', space=vmem, size = 0x800, scoped, tag = 'output window, operand 1, single buffered']
    #allocation5 [shape = 's32[1]{0}', space=sflag, size = 0x4, scoped, tag = 'scoped memory for forward.9']
    %16 = vsyncpa [#allocation3], 0
    %17 = vsyncpa [#allocation5], 0
    // Predicated region
    $region2: #{forward.9} parent=1 // pred_check
      _
    $region3: #{forward.9} parent=1 // pred_check_branch
      %19 = sbr.rel (0) target = $region5
    $region4: #{forward.9} parent=1 // pred_region
      _
    $region5: #{forward.9} parent=1 // pred_fallthru
      _
    // Predicated region
    $region6: #{forward.9} parent=1 // pred_check
      _
    $region7: #{forward.9} parent=1 // pred_check_branch
      %21 = sbr.rel (0) target = $region9
    $region8: #{forward.9} parent=1 // pred_region
      _
    $region9: #{forward.9} parent=1 // pred_fallthru
      _
    // Predicated region
    $region10: #{forward.9} parent=1 // pred_check
      _
    $region11: #{forward.9} parent=1 // pred_check_branch
      %23 = sbr.rel (0) target = $region13
    $region12: #{forward.9} parent=1 // pred_region
      _
    $region13: #{forward.9} parent=1 // pred_fallthru
      _
    // Predicated region
    $region14: #{forward.9} parent=1 // pred_check
      _
    $region15: #{forward.9} parent=1 // pred_check_branch
      %25 = sbr.rel (0) target = $region17
    $region16: #{forward.9} parent=1 // pred_region
      _
    $region17: #{forward.9} parent=1 // pred_fallthru
      _
    // Predicated region
    $region18: #{forward.9} parent=1 // pred_check
      _
    $region19: #{forward.9} parent=1 // pred_check_branch
      %27 = sbr.rel (0) target = $region21
    $region20: #{forward.9} parent=1 // pred_region
      _
    $region21: #{forward.9} parent=1 // pred_fallthru
      _
    // Predicated region
    $region22: #{forward.9} parent=1 // pred_check
      _
    $region23: #{forward.9} parent=1 // pred_check_branch
      %29 = sbr.rel (0) target = $region25
    $region24: #{forward.9} parent=1 // pred_region
      _
    $region25: #{forward.9} parent=1 // pred_fallthru
      _
    // Predicated region
    $region26: #{forward.9} parent=1 // pred_check
      _
    $region27: #{forward.9} parent=1 // pred_check_branch
      %31 = sbr.rel (0) target = $region29
    $region28: #{forward.9} parent=1 // pred_region
      _
    $region29: #{forward.9} parent=1 // pred_fallthru
      _
    // Predicated region
    $region30: #{forward.9} parent=1 // pred_check
      _
    $region31: #{forward.9} parent=1 // pred_check_branch
      %33 = sbr.rel (0) target = $region33
    $region32: #{forward.9} parent=1 // pred_region
      _
    $region33: #{forward.9} parent=1 // pred_fallthru
      _
    // Predicated region
    $region34: #{forward.9} parent=1 // pred_check
      _
    $region35: #{forward.9} parent=1 // pred_check_branch
      %35 = sbr.rel (0) target = $region37
    $region36: #{forward.9} parent=1 // pred_region
      _
    $region37: #{forward.9} parent=1 // pred_fallthru
      _
    %v37 = vld [vmem:[%s0] sm:$0xf]
    %v38 = vld [vmem:[%s1] sm:$0xf]
    %v39 = vld [vmem:[%s1 + $0x4] sm:$0xf]
    %v40 = vld [vmem:[%s1 + $0x8] sm:$0xf]
    %v41 = vld [vmem:[%s1 + $0xc] sm:$0xf]
    %v42 = vld [vmem:[%s1 + $0x10] sm:$0xf]
    %v43 = vld [vmem:[%s1 + $0x14] sm:$0xf]
    %v44 = vld [vmem:[%s1 + $0x18] sm:$0xf]
    %v45 = vld [vmem:[%s1 + $0x1c] sm:$0xf]
    %v46 = vld [vmem:[%s1 + $0x20] sm:$0xf]
    %v47 = vld [vmem:[%s1 + $0x24] sm:$0xf]
    %v48 = vld [vmem:[%s1 + $0x28] sm:$0xf]
    %v49 = vld [vmem:[%s1 + $0x2c] sm:$0xf]
    %v50 = vld [vmem:[%s1 + $0x30] sm:$0xf]
    %v51 = vld [vmem:[%s1 + $0x34] sm:$0xf]
    %v52 = vld [vmem:[%s1 + $0x38] sm:$0xf]
    %v53 = vld [vmem:[%s1 + $0x3c] sm:$0xf]
    %v54 = vld [vmem:[%s1 + $0x40] sm:$0xf]
    %v55 = vld [vmem:[%s1 + $0x44] sm:$0xf]
    %v56 = vld [vmem:[%s1 + $0x48] sm:$0xf]
    %v57 = vld [vmem:[%s1 + $0x4c] sm:$0xf]
    %v58 = vld [vmem:[%s1 + $0x50] sm:$0xf]
    %v59 = vld [vmem:[%s1 + $0x54] sm:$0xf]
    %v60 = vld [vmem:[%s1 + $0x58] sm:$0xf]
    %v61 = vld [vmem:[%s1 + $0x5c] sm:$0xf]
    %v62 = vld [vmem:[%s1 + $0x60] sm:$0xf]
    %v63 = vld [vmem:[%s1 + $0x64] sm:$0xf]
    %v64 = vld [vmem:[%s1 + $0x68] sm:$0xf]
    %v65 = vld [vmem:[%s1 + $0x6c] sm:$0xf]
    %v66 = vld [vmem:[%s1 + $0x70] sm:$0xf]
    %v67 = vld [vmem:[%s1 + $0x74] sm:$0xf]
    %v68 = vld [vmem:[%s1 + $0x78] sm:$0xf]
    %v69 = vld [vmem:[%s1 + $0x7c] sm:$0xf]
    %v70 = vld [vmem:[%s1 + $0x80] sm:$0xf]
    %v71 = vld [vmem:[%s1 + $0x84] sm:$0xf]
    %v72 = vld [vmem:[%s1 + $0x88] sm:$0xf]
    %v73 = vld [vmem:[%s1 + $0x8c] sm:$0xf]
    %v74 = vld [vmem:[%s1 + $0x90] sm:$0xf]
    %v75 = vld [vmem:[%s1 + $0x94] sm:$0xf]
    %v76 = vld [vmem:[%s1 + $0x98] sm:$0xf]
    %v77 = vld [vmem:[%s1 + $0x9c] sm:$0xf]
    %v78 = vld [vmem:[%s1 + $0xa0] sm:$0xf]
    %v79 = vld [vmem:[%s1 + $0xa4] sm:$0xf]
    %v80 = vld [vmem:[%s1 + $0xa8] sm:$0xf]
    %v81 = vld [vmem:[%s1 + $0xac] sm:$0xf]
    %v82 = vld [vmem:[%s1 + $0xb0] sm:$0xf]
    %v83 = vld [vmem:[%s1 + $0xb4] sm:$0xf]
    %v84 = vld [vmem:[%s1 + $0xb8] sm:$0xf]
    %v85 = vld [vmem:[%s1 + $0xbc] sm:$0xf]
    %v86 = vld [vmem:[%s1 + $0xc0] sm:$0xf]
    %v87 = vld [vmem:[%s1 + $0xc4] sm:$0xf]
    %v88 = vld [vmem:[%s1 + $0xc8] sm:$0xf]
    %v89 = vld [vmem:[%s1 + $0xcc] sm:$0xf]
    %v90 = vld [vmem:[%s1 + $0xd0] sm:$0xf]
    %v91 = vld [vmem:[%s1 + $0xd4] sm:$0xf]
    %v92 = vld [vmem:[%s1 + $0xd8] sm:$0xf]
    %v93 = vld [vmem:[%s1 + $0xdc] sm:$0xf]
    %v94 = vld [vmem:[%s1 + $0xe0] sm:$0xf]
    %v95 = vld [vmem:[%s1 + $0xe4] sm:$0xf]
    %v96 = vld [vmem:[%s1 + $0xe8] sm:$0xf]
    %v97 = vld [vmem:[%s1 + $0xec] sm:$0xf]
    %v98 = vld [vmem:[%s1 + $0xf0] sm:$0xf]
    %v99 = vld [vmem:[%s1 + $0xf4] sm:$0xf]
    %v100 = vld [vmem:[%s1 + $0xf8] sm:$0xf]
    %v101 = vld [vmem:[%s1 + $0xfc] sm:$0xf]
    %v102 = vld [vmem:[%s2] sm:$0x1]
    %v104 = vperm.slane %v102, 0
    %107 = vst [vmem:[#allocation1] ss:$9 sm:$0xff] %v37
    %v108 = vld [vmem:[#allocation1] sm:$0xff]
    %v109 = vld [vmem:[#allocation1 + $0x9] sm:$0xff]
    %v110 = vld [vmem:[#allocation1 + $0x12] sm:$0xff]
    %v111 = vld [vmem:[#allocation1 + $0x1b] sm:$0xff]
    %v180 = vunpack.c.l.b16 %v38
    %v181 = vunpack.c.l.b16 %v39
    %v182 = vunpack.c.l.b16 %v40
    %v183 = vunpack.c.l.b16 %v41
    %v184 = vunpack.c.l.b16 %v42
    %v185 = vunpack.c.l.b16 %v43
    %v186 = vunpack.c.l.b16 %v44
    %v187 = vunpack.c.l.b16 %v45
    %v188 = vunpack.c.l.b16 %v46
    %v189 = vunpack.c.l.b16 %v47
    %v190 = vunpack.c.l.b16 %v48
    %v191 = vunpack.c.l.b16 %v49
    %v192 = vunpack.c.l.b16 %v50
    %v193 = vunpack.c.l.b16 %v51
    %v194 = vunpack.c.l.b16 %v52
    %v195 = vunpack.c.l.b16 %v53
    %v196 = vunpack.c.l.b16 %v54
    %v197 = vunpack.c.l.b16 %v55
    %v198 = vunpack.c.l.b16 %v56
    %v199 = vunpack.c.l.b16 %v57
    %v200 = vunpack.c.l.b16 %v58
    %v201 = vunpack.c.l.b16 %v59
    %v202 = vunpack.c.l.b16 %v60
    %v203 = vunpack.c.l.b16 %v61
    %v204 = vunpack.c.l.b16 %v62
    %v205 = vunpack.c.l.b16 %v63
    %v206 = vunpack.c.l.b16 %v64
    %v207 = vunpack.c.l.b16 %v65
    %v208 = vunpack.c.l.b16 %v66
    %v209 = vunpack.c.l.b16 %v67
    %v210 = vunpack.c.l.b16 %v68
    %v211 = vunpack.c.l.b16 %v69
    %v212 = vunpack.c.l.b16 %v70
    %v213 = vunpack.c.l.b16 %v71
    %v214 = vunpack.c.l.b16 %v72
    %v215 = vunpack.c.l.b16 %v73
    %v216 = vunpack.c.l.b16 %v74
    %v217 = vunpack.c.l.b16 %v75
    %v218 = vunpack.c.l.b16 %v76
    %v219 = vunpack.c.l.b16 %v77
    %v220 = vunpack.c.l.b16 %v78
    %v221 = vunpack.c.l.b16 %v79
    %v222 = vunpack.c.l.b16 %v80
    %v223 = vunpack.c.l.b16 %v81
    %v224 = vunpack.c.l.b16 %v82
    %v225 = vunpack.c.l.b16 %v83
    %v226 = vunpack.c.l.b16 %v84
    %v227 = vunpack.c.l.b16 %v85
    %v228 = vunpack.c.l.b16 %v86
    %v229 = vunpack.c.l.b16 %v87
    %v230 = vunpack.c.l.b16 %v88
    %v231 = vunpack.c.l.b16 %v89
    %v232 = vunpack.c.l.b16 %v90
    %v233 = vunpack.c.l.b16 %v91
    %v234 = vunpack.c.l.b16 %v92
    %v235 = vunpack.c.l.b16 %v93
    %v236 = vunpack.c.l.b16 %v94
    %v237 = vunpack.c.l.b16 %v95
    %v238 = vunpack.c.l.b16 %v96
    %v239 = vunpack.c.l.b16 %v97
    %v240 = vunpack.c.l.b16 %v98
    %v241 = vunpack.c.l.b16 %v99
    %v242 = vunpack.c.l.b16 %v100
    %v243 = vunpack.c.l.b16 %v101
    %v244 = vpack.c.b16 %v181, %v180
    %v245 = vpack.c.b16 %v183, %v182
    %v246 = vpack.c.b16 %v185, %v184
    %v247 = vpack.c.b16 %v187, %v186
    %v248 = vpack.c.b16 %v189, %v188
    %v249 = vpack.c.b16 %v191, %v190
    %v250 = vpack.c.b16 %v193, %v192
    %v251 = vpack.c.b16 %v195, %v194
    %v252 = vpack.c.b16 %v197, %v196
    %v253 = vpack.c.b16 %v199, %v198
    %v254 = vpack.c.b16 %v201, %v200
    %v255 = vpack.c.b16 %v203, %v202
    %v256 = vpack.c.b16 %v205, %v204
    %v257 = vpack.c.b16 %v207, %v206
    %v258 = vpack.c.b16 %v209, %v208
    %v259 = vpack.c.b16 %v211, %v210
    %v260 = vpack.c.b16 %v213, %v212
    %v261 = vpack.c.b16 %v215, %v214
    %v262 = vpack.c.b16 %v217, %v216
    %v263 = vpack.c.b16 %v219, %v218
    %v264 = vpack.c.b16 %v221, %v220
    %v265 = vpack.c.b16 %v223, %v222
    %v266 = vpack.c.b16 %v225, %v224
    %v267 = vpack.c.b16 %v227, %v226
    %v268 = vpack.c.b16 %v229, %v228
    %v269 = vpack.c.b16 %v231, %v230
    %v270 = vpack.c.b16 %v233, %v232
    %v271 = vpack.c.b16 %v235, %v234
    %v272 = vpack.c.b16 %v237, %v236
    %v273 = vpack.c.b16 %v239, %v238
    %v274 = vpack.c.b16 %v241, %v240
    %v275 = vpack.c.b16 %v243, %v242
    %308 = vmatpush.bf16.msra.mxu0 %v251
    %309 = vmatpush.bf16.msra.mxu0 %v250
    %310 = vmatpush.bf16.msra.mxu0 %v249
    %311 = vmatpush.bf16.msra.mxu0 %v248
    %312 = vmatpush.bf16.msra.mxu0 %v247
    %313 = vmatpush.bf16.msra.mxu0 %v246
    %314 = vmatpush.bf16.msra.mxu0 %v245
    %315 = vmatpush.bf16.msra.mxu0 %v244
    %316 = vmatmul.bf16.gmra.mxu0 %v108
    %v317 = vpop.f32.mrf.mxu0
    %v318 = vadd.f32 %v104, %v317
    %v319 = vpop.f32.mrf.mxu0
    %320 = vdwg.mxu0
    %321 = vmatpush.bf16.msra.mxu0 %v259
    %322 = vmatpush.bf16.msra.mxu0 %v258
    %323 = vmatpush.bf16.msra.mxu0 %v257
    %324 = vmatpush.bf16.msra.mxu0 %v256
    %325 = vmatpush.bf16.msra.mxu0 %v255
    %326 = vmatpush.bf16.msra.mxu0 %v254
    %327 = vmatpush.bf16.msra.mxu0 %v253
    %328 = vmatpush.bf16.msra.mxu0 %v252
    %329 = vmatmul.bf16.gmra.mxu0 %v109
    %v330 = vpop.f32.mrf.mxu0
    %v331 = vadd.f32 %v318, %v330
    %v332 = vpop.f32.mrf.mxu0
    %333 = vdwg.mxu0
    %334 = vmatpush.bf16.msra.mxu0 %v267
    %335 = vmatpush.bf16.msra.mxu0 %v266
    %336 = vmatpush.bf16.msra.mxu0 %v265
    %337 = vmatpush.bf16.msra.mxu0 %v264
    %338 = vmatpush.bf16.msra.mxu0 %v263
    %339 = vmatpush.bf16.msra.mxu0 %v262
    %340 = vmatpush.bf16.msra.mxu0 %v261
    %341 = vmatpush.bf16.msra.mxu0 %v260
    %342 = vmatmul.bf16.gmra.mxu0 %v110
    %v343 = vpop.f32.mrf.mxu0
    %v344 = vadd.f32 %v331, %v343
    %v345 = vpop.f32.mrf.mxu0
    %346 = vdwg.mxu0
    %347 = vmatpush.bf16.msra.mxu0 %v275
    %348 = vmatpush.bf16.msra.mxu0 %v274
    %349 = vmatpush.bf16.msra.mxu0 %v273
    %350 = vmatpush.bf16.msra.mxu0 %v272
    %351 = vmatpush.bf16.msra.mxu0 %v271
    %352 = vmatpush.bf16.msra.mxu0 %v270
    %353 = vmatpush.bf16.msra.mxu0 %v269
    %354 = vmatpush.bf16.msra.mxu0 %v268
    %355 = vmatmul.bf16.gmra.mxu0 %v111
    %v356 = vpop.f32.mrf.mxu0
    %v357 = vadd.f32 %v344, %v356
    %v358 = vpop.f32.mrf.mxu0
    %359 = vdwg.mxu0
    %vm360 = vcmask 254976
    %361 = vst.msk [vmem:[#allocation2] sm:$0x3] %vm360, %v357
    %v362 = vpack.c.bf16 %v357, %v357
    %v363 = vld [vmem:[%s3] sm:$0xf]
    %v364 = vld [vmem:[%s3 + $0x4] sm:$0xf]
    %v365 = vld [vmem:[%s3 + $0x8] sm:$0xf]
    %v366 = vld [vmem:[%s3 + $0xc] sm:$0xf]
    %v367 = vld [vmem:[%s4] sm:$0x1]
    %v369 = vperm.slane %v367, 0
    %v375 = vunpack.c.l.b16 %v363
    %v376 = vunpack.c.l.b16 %v364
    %v377 = vunpack.c.l.b16 %v365
    %v378 = vunpack.c.l.b16 %v366
    %v379 = vpack.c.b16 %v376, %v375
    %v380 = vpack.c.b16 %v378, %v377
    %vm383 = vcmask 261120
    %v385 = vsel %vm383, %v362, 0
    %387 = vmatpush.bf16.msra.mxu0 0
    %388 = vmatpush.bf16.msra.mxu0 0
    %389 = vmatpush.bf16.msra.mxu0 0
    %390 = vmatpush.bf16.msra.mxu0 0
    %391 = vmatpush.bf16.msra.mxu0 0
    %392 = vmatpush.bf16.msra.mxu0 0
    %393 = vmatpush.bf16.msra.mxu0 %v380
    %394 = vmatpush.bf16.msra.mxu0 %v379
    %395 = vmatmul.bf16.gmra.mxu0 %v385
    %v396 = vpop.f32.mrf.mxu0
    %v397 = vadd.f32 %v369, %v396
    %v398 = vpop.f32.mrf.mxu0
    %399 = vdwg.mxu0
    %vm400 = vcmp.ge.f32.partialorder %v397, 0.0
    %v401 = vmul.f32 %v397, 0.01
    %v402 = vsel %vm400, %v397, %v401
    %v403 = vpack.c.bf16 %v402, %v402
    %v404 = vld [vmem:[%s5] sm:$0xf]
    %v405 = vld [vmem:[%s5 + $0x4] sm:$0xf]
    %v406 = vld [vmem:[%s5 + $0x8] sm:$0xf]
    %v407 = vld [vmem:[%s5 + $0xc] sm:$0xf]
    %v408 = vld [vmem:[%s5 + $0x10] sm:$0xf]
    %v409 = vld [vmem:[%s5 + $0x14] sm:$0xf]
    %v410 = vld [vmem:[%s5 + $0x18] sm:$0xf]
    %v411 = vld [vmem:[%s5 + $0x1c] sm:$0xf]
    %v412 = vld [vmem:[%s6] sm:$0x1]
    %v414 = vperm.slane %v412, 0
    %v424 = vunpack.c.l.b16 %v404
    %v425 = vunpack.c.l.b16 %v405
    %v426 = vunpack.c.l.b16 %v406
    %v427 = vunpack.c.l.b16 %v407
    %v428 = vunpack.c.l.b16 %v408
    %v429 = vunpack.c.l.b16 %v409
    %v430 = vunpack.c.l.b16 %v410
    %v431 = vunpack.c.l.b16 %v411
    %v432 = vpack.c.b16 %v425, %v424
    %v433 = vpack.c.b16 %v427, %v426
    %v434 = vpack.c.b16 %v429, %v428
    %v435 = vpack.c.b16 %v431, %v430
    %vm440 = vcmask 523264
    %v442 = vsel %vm440, %v403, 0
    %444 = vmatpush.bf16.msra.mxu0 0
    %445 = vmatpush.bf16.msra.mxu0 0
    %446 = vmatpush.bf16.msra.mxu0 0
    %447 = vmatpush.bf16.msra.mxu0 0
    %448 = vmatpush.bf16.msra.mxu0 %v435
    %449 = vmatpush.bf16.msra.mxu0 %v434
    %450 = vmatpush.bf16.msra.mxu0 %v433
    %451 = vmatpush.bf16.msra.mxu0 %v432
    %452 = vmatmul.bf16.gmra.mxu0 %v442
    %v453 = vpop.f32.mrf.mxu0
    %v454 = vadd.f32 %v414, %v453
    %v455 = vpop.f32.mrf.mxu0
    %456 = vdwg.mxu0
    %vm457 = vcmp.ge.f32.partialorder %v454, 0.0
    %v458 = vmul.f32 %v454, 0.01
    %v459 = vsel %vm457, %v454, %v458
    %v460 = vpack.c.bf16 %v459, %v459
    %v461 = vld [vmem:[%s7] sm:$0xff]
    %v462 = vld [vmem:[%s7 + $0x8] sm:$0xff]
    %v463 = vld [vmem:[%s7 + $0x10] sm:$0xff]
    %v464 = vld [vmem:[%s7 + $0x18] sm:$0xff]
    %v465 = vld [vmem:[%s7 + $0x20] sm:$0xff]
    %v466 = vld [vmem:[%s7 + $0x28] sm:$0xff]
    %v467 = vld [vmem:[%s7 + $0x30] sm:$0xff]
    %v468 = vld [vmem:[%s7 + $0x38] sm:$0xff]
    %v469 = vld [vmem:[%s7 + $0x40] sm:$0xff]
    %v470 = vld [vmem:[%s7 + $0x48] sm:$0xff]
    %v471 = vld [vmem:[%s7 + $0x50] sm:$0xff]
    %v472 = vld [vmem:[%s7 + $0x58] sm:$0xff]
    %v473 = vld [vmem:[%s7 + $0x60] sm:$0xff]
    %v474 = vld [vmem:[%s7 + $0x68] sm:$0xff]
    %v475 = vld [vmem:[%s7 + $0x70] sm:$0xff]
    %v476 = vld [vmem:[%s7 + $0x78] sm:$0xff]
    %v477 = vld [vmem:[%s8] sm:$0x3]
    %v479 = vperm.slane %v477, 0
    %v480 = vperm.slane %v477, 1
    %v499 = vunpack.c.l.b16 %v461
    %v500 = vunpack.c.h.b16 %v461
    %v501 = vunpack.c.l.b16 %v462
    %v502 = vunpack.c.h.b16 %v462
    %v503 = vunpack.c.l.b16 %v463
    %v504 = vunpack.c.h.b16 %v463
    %v505 = vunpack.c.l.b16 %v464
    %v506 = vunpack.c.h.b16 %v464
    %v507 = vunpack.c.l.b16 %v465
    %v508 = vunpack.c.h.b16 %v465
    %v509 = vunpack.c.l.b16 %v466
    %v510 = vunpack.c.h.b16 %v466
    %v511 = vunpack.c.l.b16 %v467
    %v512 = vunpack.c.h.b16 %v467
    %v513 = vunpack.c.l.b16 %v468
    %v514 = vunpack.c.h.b16 %v468
    %v515 = vunpack.c.l.b16 %v469
    %v516 = vunpack.c.h.b16 %v469
    %v517 = vunpack.c.l.b16 %v470
    %v518 = vunpack.c.h.b16 %v470
    %v519 = vunpack.c.l.b16 %v471
    %v520 = vunpack.c.h.b16 %v471
    %v521 = vunpack.c.l.b16 %v472
    %v522 = vunpack.c.h.b16 %v472
    %v523 = vunpack.c.l.b16 %v473
    %v524 = vunpack.c.h.b16 %v473
    %v525 = vunpack.c.l.b16 %v474
    %v526 = vunpack.c.h.b16 %v474
    %v527 = vunpack.c.l.b16 %v475
    %v528 = vunpack.c.h.b16 %v475
    %v529 = vunpack.c.l.b16 %v476
    %v530 = vunpack.c.h.b16 %v476
    %v531 = vpack.c.b16 %v501, %v499
    %v532 = vpack.c.b16 %v502, %v500
    %v533 = vpack.c.b16 %v505, %v503
    %v534 = vpack.c.b16 %v506, %v504
    %v535 = vpack.c.b16 %v509, %v507
    %v536 = vpack.c.b16 %v510, %v508
    %v537 = vpack.c.b16 %v513, %v511
    %v538 = vpack.c.b16 %v514, %v512
    %v539 = vpack.c.b16 %v517, %v515
    %v540 = vpack.c.b16 %v518, %v516
    %v541 = vpack.c.b16 %v521, %v519
    %v542 = vpack.c.b16 %v522, %v520
    %v543 = vpack.c.b16 %v525, %v523
    %v544 = vpack.c.b16 %v526, %v524
    %v545 = vpack.c.b16 %v529, %v527
    %v546 = vpack.c.b16 %v530, %v528
    %563 = vmatpush.bf16.msra.mxu0 %v545
    %564 = vmatpush.bf16.msra.mxu0 %v543
    %565 = vmatpush.bf16.msra.mxu0 %v541
    %566 = vmatpush.bf16.msra.mxu0 %v539
    %567 = vmatpush.bf16.msra.mxu0 %v537
    %568 = vmatpush.bf16.msra.mxu0 %v535
    %569 = vmatpush.bf16.msra.mxu0 %v533
    %570 = vmatpush.bf16.msra.mxu0 %v531
    %571 = vmatmul.bf16.gmra.mxu0 %v460
    %v572 = vpop.f32.mrf.mxu0
    %v573 = vadd.f32 %v479, %v572
    %v574 = vpop.f32.mrf.mxu0
    %575 = vdwg.mxu0
    %576 = vmatpush.bf16.msra.mxu0 %v546
    %577 = vmatpush.bf16.msra.mxu0 %v544
    %578 = vmatpush.bf16.msra.mxu0 %v542
    %579 = vmatpush.bf16.msra.mxu0 %v540
    %580 = vmatpush.bf16.msra.mxu0 %v538
    %581 = vmatpush.bf16.msra.mxu0 %v536
    %582 = vmatpush.bf16.msra.mxu0 %v534
    %583 = vmatpush.bf16.msra.mxu0 %v532
    %584 = vmatmul.bf16.gmra.mxu0 %v460
    %v585 = vpop.f32.mrf.mxu0
    %v586 = vadd.f32 %v480, %v585
    %v587 = vpop.f32.mrf.mxu0
    %588 = vdwg.mxu0
    %vm589 = vcmp.ge.f32.partialorder %v573, 0.0
    %vm590 = vcmp.ge.f32.partialorder %v586, 0.0
    %v591 = vmul.f32 %v573, 0.01
    %v592 = vmul.f32 %v586, 0.01
    %v593 = vsel %vm589, %v573, %v591
    %v594 = vsel %vm590, %v586, %v592
    %v597 = vrot.slane %v594, 6
    %vm598 = vcmask 1041408
    %v599 = vsel %vm598, %v593, %v597
    %601 = vst [vmem:[#allocation4] sm:$0xf] %v599
    // Predicated region
    $region38: #{forward.9} parent=1 // pred_check
      _
    $region39: #{forward.9} parent=1 // pred_check_branch
      %603 = sbr.rel (0) target = $region41
    $region40: #{forward.9} parent=1 // pred_region
      %605 = vsyncadd [#allocation3], 0
      %s607 = sshll.u32 [#allocation2], 4
      %s608 = int_to_ptr.vmem [resolvable:$true] %s607
      %s609 = sshll.u32 %s9, 4
      %s610 = int_to_ptr.hbm [resolvable:$true] %s609
      %612 = dma.vmem_to_hbm [thread:$0]  %s608, 32, %s610, [#allocation3]
    $region41: #{forward.9} parent=1 // pred_fallthru
      _
    // Predicated region
    $region42: #{forward.9} parent=1 // pred_check
      _
    $region43: #{forward.9} parent=1 // pred_check_branch
      %614 = sbr.rel (0) target = $region45
    $region44: #{forward.9} parent=1 // pred_region
      %616 = vsyncadd [#allocation5], 0
      %s618 = sshll.u32 [#allocation4], 4
      %s619 = int_to_ptr.vmem [resolvable:$true] %s618
      %s620 = sshll.u32 %s10, 4
      %s621 = int_to_ptr.hbm [resolvable:$true] %s620
      %623 = dma.vmem_to_hbm [thread:$0]  %s619, 64, %s621, [#allocation5]
    $region45: #{forward.9} parent=1 // pred_fallthru
      _
    // Predicated region
    $region46: #{forward.9} parent=1 // pred_check
      _
    $region47: #{forward.9} parent=1 // pred_check_branch
      %625 = sbr.rel (0) target = $region49
    $region48: #{forward.9} parent=1 // pred_region
      %627 = dma.done [#allocation3], 32
    $region49: #{forward.9} parent=1 // pred_fallthru
      _
    // Predicated region
    $region50: #{forward.9} parent=1 // pred_check
      _
    $region51: #{forward.9} parent=1 // pred_check_branch
      %629 = sbr.rel (0) target = $region53
    $region52: #{forward.9} parent=1 // pred_region
      %631 = dma.done [#allocation5], 64
    $region53: #{forward.9} parent=1 // pred_fallthru
      _
    %632 = vsyncpa [#allocation3], 1
    %633 = vsyncpa [#allocation5], 1

</llo_original>
